<compile_context>
chip_gen: v6e
topology: v6e:2x2x1
jax: 0.10.0
libtpu: 0.0.40
codegen_flags: <defaults>
</compile_context>

<pallas_src>
import functools
import math

import jax
import jax.numpy as jnp
import numpy as np
from jax import lax
from jax.experimental import pallas as pl
from jax.experimental.pallas import tpu as pltpu

_NT = (((1,), (1,)), ((), ()))  # contract last dims of both operands (y @ W.T)


# --------------------------------------------------------------------------
# Host-side weight fusion & packing (done once).
# --------------------------------------------------------------------------
def _avg_matrix(L, k):
    """(L, L) matrix A with  moving_mean = row @ A  (replicate-padded AvgPool1d)."""
    pad = (k - 1) // 2
    A = np.zeros((L, L), np.float32)
    for t in range(L):
        for i in range(t, t + k):
            s = min(max(i - pad, 0), L - 1)
            A[s, t] += 1.0 / k
    return A


def _fuse_intra(w1, b1, w2, b2, pn, pp, core):
    """intra-patch MLP (Linear over patch dim) as block-diagonal row matmuls."""
    L = pn * pp
    a1 = np.zeros((L, pn * core), np.float32)
    a2 = np.zeros((pn * core, L), np.float32)
    for i in range(pn):
        a1[i * pp:(i + 1) * pp, i * core:(i + 1) * core] = w1.T
        a2[i * core:(i + 1) * core, i * pp:(i + 1) * pp] = w2.T
    return a1, np.tile(b1, pn), a2, np.tile(b2, pn)


def _fuse_inter(w1, b1, w2, b2, pn, pp, core):
    """inter-patch MLP (Linear over patch_num dim) as block-interleaved row matmuls."""
    L = pn * pp
    a1 = np.zeros((L, pp * core), np.float32)
    a2 = np.zeros((pp * core, L), np.float32)
    for i in range(pn):
        for j in range(pp):
            a1[i * pp + j, j * core:(j + 1) * core] = w1[:, i]
            a2[j * core:(j + 1) * core, i * pp + j] = w2[i, :]
    return a1, np.tile(b1, pp), a2, np.repeat(b2, pp)


def _blockdiag(a, b):
    out = np.zeros((a.shape[0] + b.shape[0], a.shape[1] + b.shape[1]), np.float32)
    out[:a.shape[0], :a.shape[1]] = a
    out[a.shape[0]:, a.shape[1]:] = b
    return out


def _pack_rows(entries, width):
    """Stack small 1-/2-D arrays into one (rows, width) f32 slab.

    Every entry is padded to `width` lanes and an 8-row multiple so every
    in-kernel view is a tile-aligned static slice (free).  Returns (slab, offsets).
    """
    offsets, chunks, row = {}, [], 0
    for name, arr in entries:
        a = np.asarray(arr, np.float32)
        if a.ndim == 1:
            a = a[None, :]
        h, w = a.shape
        assert w <= width, (name, a.shape, width)
        ph = ((h + 7) // 8) * 8
        buf = np.zeros((ph, width), np.float32)
        buf[:h, :w] = a
        offsets[name] = row
        chunks.append(buf)
        row += ph
    return np.concatenate(chunks, axis=0), offsets


def fuse_params(params, B, C, L, d_model, core, pp, pn):
    f = lambda a: np.asarray(a, np.float32)

    # series_decomp folded into one matmul:  [trend | season] = x_rows @ a_dec
    a_avg = _avg_matrix(L, pp + 1)
    a_dec = np.concatenate([a_avg, np.eye(L, dtype=np.float32) - a_avg], axis=1)

    # trend/season intra stage fused into one lane-block-diagonal MLP
    ti, si = params["t_intra"], params["s_intra"]
    t1, tb1, t2, tb2 = _fuse_intra(f(ti["w1"]), f(ti["b1"]), f(ti["w2"]), f(ti["b2"]), pn, pp, core)
    s1, sb1, s2, sb2 = _fuse_intra(f(si["w1"]), f(si["b1"]), f(si["w2"]), f(si["b2"]), pn, pp, core)
    w1_intra, b1_intra = _blockdiag(t1, s1), np.concatenate([tb1, sb1])
    w2t_intra, b2_intra = _blockdiag(t2, s2).T, np.concatenate([tb2, sb2])
    sc_intra = np.concatenate([f(ti["scale"]).reshape(-1), f(si["scale"]).reshape(-1)])

    # trend/season inter stage
    te, se = params["t_inter"], params["s_inter"]
    t1, tb1, t2, tb2 = _fuse_inter(f(te["w1"]), f(te["b1"]), f(te["w2"]), f(te["b2"]), pn, pp, core)
    s1, sb1, s2, sb2 = _fuse_inter(f(se["w1"]), f(se["b1"]), f(se["w2"]), f(se["b2"]), pn, pp, core)
    w1_inter, b1_inter = _blockdiag(t1, s1), np.concatenate([tb1, sb1])
    w2t_inter, b2_inter = _blockdiag(t2, s2).T, np.concatenate([tb2, sb2])
    sc_inter = np.concatenate([f(te["scale"]).T.reshape(-1), f(se["scale"]).T.reshape(-1)])

    h_intra = 2 * pn * core
    h_inter = 2 * pp * core
    wide = max(h_intra, h_inter)

    # block matrix averaging rows within a batch (per-batch slab RMSNorm, no B-loop)
    gb = np.kron(np.eye(B, dtype=np.float32), np.full((C, C), 1.0 / C, np.float32))

    m, r, lin = params["mlp"], params["rnn_ffn"], params["linear"]
    narrow = max(2 * L, d_model, B * C)

    slab_wide, off_wide = _pack_rows([
        ("w1_intra", w1_intra), ("w2t_intra", w2t_intra), ("b1_intra", b1_intra),
        ("w1_inter", w1_inter), ("w2t_inter", w2t_inter), ("b1_inter", b1_inter),
    ], wide)

    slab_narrow, off_narrow = _pack_rows([
        ("a_dec", a_dec),
        ("sc_intra", sc_intra), ("b2_intra", b2_intra),
        ("sc_inter", sc_inter), ("b2_inter", b2_inter),
        ("gb", gb),
        ("sc_m", np.tile(f(m["scale"]), (B, 1))), ("w1_m", f(m["w1"]).T),
        ("b1_m", f(m["b1"])), ("w2_m", f(m["w2"]).T), ("b2_m", f(m["b2"])),
        ("sc_r", np.tile(f(r["scale"]), (B, 1))), ("w1_r", f(r["w1"]).T),
        ("b1_r", f(r["b1"])), ("w2_r", f(r["w2"]).T), ("b2_r", f(r["b2"])),
        ("wl", f(lin["w"])), ("bl", f(lin["b"])[:, None]),
    ], narrow)

    return dict(slab_wide=jnp.asarray(slab_wide), slab_narrow=jnp.asarray(slab_narrow),
                off_wide=off_wide, off_narrow=off_narrow,
                h_intra=h_intra, h_inter=h_inter)


# --------------------------------------------------------------------------
# The fused forward kernel (single block, whole problem resident in VMEM).
# --------------------------------------------------------------------------
def _multiscale_mlp_kernel(x_ref, wide_ref, nar_ref, out_ref, *,
                           ow, on, B, C, L, d_model, h_intra, h_inter):
    f32 = jnp.float32
    M, L2 = B * C, 2 * L

    def wv(name, rows, cols):            # static view into the 512-lane slab
        return wide_ref[ow[name]:ow[name] + rows, 0:cols]

    def nv(name, rows, cols):            # static view into the 32-lane slab
        return nar_ref[on[name]:on[name] + rows, 0:cols]

    # lane mask: first L lanes hold the trend half, last L lanes the season half
    lane = lax.broadcasted_iota(jnp.int32, (M, L2), 1)
    is_trend = lane < L

    def patch_mlp(z, sc, w1, b1, w2t, b2):
        # independent per-row RMSNorm of each half + fused Linear/ReLU/Linear
        zz = z * z
        s_all = jnp.sum(zz, axis=-1, keepdims=True)
        s_t = jnp.sum(jnp.where(is_trend, zz, 0.0), axis=-1, keepdims=True)
        inv_t = lax.rsqrt(s_t * (1.0 / L) + 1e-8)
        inv_s = lax.rsqrt((s_all - s_t) * (1.0 / L) + 1e-8)
        y = sc * z * jnp.where(is_trend, inv_t, inv_s)
        h = jnp.maximum(jnp.dot(y, w1, preferred_element_type=f32) + b1, 0.0)
        return lax.dot_general(h, w2t, _NT, preferred_element_type=f32) + b2

    def slab_mlp(z, sc, w1, b1, w2, b2, gb):
        # RMSNorm over each (C, L) batch slab: gb averages rows within a batch,
        # so all B*C rows are processed by single matmuls (no per-batch loop).
        bm = jnp.mean(jnp.dot(gb, z * z, preferred_element_type=f32),
                      axis=-1, keepdims=True)
        y = sc * z * lax.rsqrt(bm + 1e-8)
        h = jnp.maximum(jnp.dot(y, w1, preferred_element_type=f32) + b1, 0.0)
        return jnp.dot(h, w2, preferred_element_type=f32) + b2

    x = x_ref[...]                                                    # (M, L) rows

    # series_decomp folded into one matmul:  z = [trend | season]
    z = jnp.dot(x, nv("a_dec", L, L2), preferred_element_type=f32)    # (M, 2L)
    # fused t/s intra-patch MLP (residual), then fused t/s inter-patch MLP (residual)
    z = z + patch_mlp(z, nv("sc_intra", 1, L2),
                      wv("w1_intra", L2, h_intra), wv("b1_intra", 1, h_intra),
                      wv("w2t_intra", L2, h_intra), nv("b2_intra", 1, L2))
    z = z + patch_mlp(z, nv("sc_inter", 1, L2),
                      wv("w1_inter", L2, h_inter), wv("b1_inter", 1, h_inter),
                      wv("w2t_inter", L2, h_inter), nv("b2_inter", 1, L2))
    add_patch = z[:, 0:L] + z[:, L:L2]                                # trend + season

    gb = nv("gb", M, M)
    # add = self.mlp(x) + patch contribution ; x_new = x + rnn_ffn(add)
    add_rows = slab_mlp(x, nv("sc_m", M, L), nv("w1_m", L, d_model),
                        nv("b1_m", 1, d_model), nv("w2_m", d_model, L),
                        nv("b2_m", 1, L), gb) + add_patch
    xn = x + slab_mlp(add_rows, nv("sc_r", M, L), nv("w1_r", L, d_model),
                      nv("b1_r", 1, d_model), nv("w2_r", d_model, L),
                      nv("b2_r", 1, L), gb)

    # final 1x1 Conv1d(seq_len -> d_model), emitted directly in (B, d_model, C)
    # layout via MXU-native NT matmuls (no transposes, no wrapper-side HLOs).
    wl = nv("wl", d_model, L)            # (d_model, L) torch Conv1d weight layout
    bl = nv("bl", d_model, 1)            # (d_model, 1)
    for b in range(B):                   # B is tiny & static
        xb = xn[b * C:(b + 1) * C, :]                                 # (C, L)
        out_ref[b] = lax.dot_general(wl, xb, _NT, preferred_element_type=f32) + bl


def make_multiscale_mlp(fused, B, C, L, d_model):
    """Returns a jitted forward(x, x_mark_enc) -> (B, d_model, C)."""
    M = B * C
    h_i, h_e = fused["h_intra"], fused["h_inter"]
    kernel = functools.partial(
        _multiscale_mlp_kernel, ow=fused["off_wide"], on=fused["off_narrow"],
        B=B, C=C, L=L, d_model=d_model, h_intra=h_i, h_inter=h_e)

    flops = int(2 * M * L * (2 * L)                              # decomp
                + 4 * M * (2 * L) * (h_i + h_e)                  # intra + inter MLPs
                + 2 * (2 * M * M * L + 4 * M * L * d_model)      # mlp + rnn_ffn (incl. gb)
                + 2 * M * L * d_model)                           # final 1x1 conv
    bytes_accessed = int(4 * (M * L + fused["slab_wide"].size
                              + fused["slab_narrow"].size + B * d_model * C))

    call = pl.pallas_call(
        kernel,
        out_shape=jax.ShapeDtypeStruct((B, d_model, C), jnp.float32),
        in_specs=[pl.BlockSpec(memory_space=pltpu.MemorySpace.VMEM)] * 3,
        out_specs=pl.BlockSpec(memory_space=pltpu.MemorySpace.VMEM),
        compiler_params=pltpu.CompilerParams(
            allow_input_fusion=[True, False, False]),
        cost_estimate=pl.CostEstimate(flops=flops, transcendentals=6 * M,
                                      bytes_accessed=bytes_accessed),
    )
    slab_wide, slab_narrow = fused["slab_wide"], fused["slab_narrow"]

    @jax.jit
    def forward(x, x_mark_enc):
        del x_mark_enc                    # unused by the original forward
        Bx, Lx, Cx = x.shape
        # row layout: one length-L series per (batch, channel); XLA may fuse this
        # permute into the kernel's input DMA (allow_input_fusion above).
        x_rows = jnp.transpose(x, (0, 2, 1)).reshape(Bx * Cx, Lx)
        return call(x_rows, slab_wide, slab_narrow)

    return forward


# --------------------------------------------------------------------------
# Pure-JAX reference (direct translation of the PyTorch module, HIGHEST precision).
# --------------------------------------------------------------------------
def _rmsnorm_ref(x, scale, eps=1e-8):
    rms = jnp.sqrt(jnp.mean(x * x, axis=(-2, -1), keepdims=True) + eps)
    return scale * x / rms


def _mlp_block_ref(x, p):
    hp = jax.lax.Precision.HIGHEST
    y = _rmsnorm_ref(x, p["scale"])
    h = jax.nn.relu(jnp.einsum("...i,oi->...o", y, p["w1"], precision=hp) + p["b1"])
    return jnp.einsum("...i,oi->...o", h, p["w2"], precision=hp) + p["b2"]


def _series_decomp_ref(x, k):
    pad = (k - 1) // 2
    front = jnp.repeat(x[:, :1, :], pad, axis=1)
    end = jnp.repeat(x[:, -1:, :], pad, axis=1)
    xp = jnp.concatenate([front, x, end], axis=1)
    L = x.shape[1]
    mean = jnp.mean(jnp.stack([xp[:, i:i + L, :] for i in range(k)], axis=0), axis=0)
    return x - mean, mean   # (res, moving_mean)


def multiscale_mlp_ref(x, x_mark_enc, params, patch, d_model):
    del x_mark_enc
    hp = jax.lax.Precision.HIGHEST
    B, L, C = x.shape
    add = jnp.zeros((B, L, C), jnp.float32)
    for pp in patch:
        if pp == 1:
            add = jnp.transpose(
                _mlp_block_ref(jnp.transpose(x, (0, 2, 1)), params["mlp"]), (0, 2, 1))
        else:
            pn = L // pp
            season, x_group = _series_decomp_ref(x, pp + 1)
            xg = jnp.transpose(x_group, (0, 2, 1)).reshape(B, C, pn, pp)
            xg = xg + _mlp_block_ref(xg, params["t_intra"])
            xg = jnp.transpose(xg, (0, 1, 3, 2))
            xg = xg + _mlp_block_ref(xg, params["t_inter"])
            xg = jnp.transpose(jnp.transpose(xg, (0, 1, 3, 2)).reshape(B, C, L), (0, 2, 1))
            sg = jnp.transpose(season, (0, 2, 1)).reshape(B, C, pn, pp)
            sg = sg + _mlp_block_ref(sg, params["s_intra"])
            sg = jnp.transpose(sg, (0, 1, 3, 2))
            sg = sg + _mlp_block_ref(sg, params["s_inter"])
            sg = jnp.transpose(jnp.transpose(sg, (0, 1, 3, 2)).reshape(B, C, L), (0, 2, 1))
            add = add + (xg + sg)
    x_new = x + jnp.transpose(
        _mlp_block_ref(jnp.transpose(add, (0, 2, 1)), params["rnn_ffn"]), (0, 2, 1))
    out = (jnp.einsum("blc,dl->bdc", x_new, params["linear"]["w"], precision=hp)
           + params["linear"]["b"][None, :, None])
    return out


# --------------------------------------------------------------------------
# Deterministic parameter init (shapes mirror the module's __init__).
# --------------------------------------------------------------------------
def init_params(key, C, L, d_model, core, pp, pn):
    keys = jax.random.split(key, 32)
    it = iter(keys)

    def lin(kk, fan_in, shape):
        b = 1.0 / math.sqrt(fan_in)
        return jax.random.uniform(kk, shape, jnp.float32, minval=-b, maxval=b)

    def scale(kk, shape):
        return 1.0 + 0.1 * jax.random.normal(kk, shape, jnp.float32)

    def mlp_blk(dim1, dim2, dm, dout):
        return dict(scale=scale(next(it), (dim1, dim2)),
                    w1=lin(next(it), dim2, (dm, dim2)), b1=lin(next(it), dim2, (dm,)),
                    w2=lin(next(it), dm, (dout, dm)), b2=lin(next(it), dm, (dout,)))

    return dict(
        mlp=mlp_blk(C, L, d_model, L),
        t_intra=mlp_blk(pn, pp, core, pp),
        t_inter=mlp_blk(pp, pn, core, pn),
        s_intra=mlp_blk(pn, pp, core, pp),
        s_inter=mlp_blk(pp, pn, core, pn),
        rnn_ffn=mlp_blk(C, L, d_model, L),
        linear=dict(w=lin(next(it), L, (d_model, L)), b=lin(next(it), L, (d_model,))),
    )


if __name__ == "__main__":
    # configs: enc_in=4, freq='h' (+4 time features) -> C=8, seq_len=16,
    #          d_model=32, temporal_function='patch', patch=[1, 4], core=64.
    B = 2
    enc_in_cfg = 4
    C = enc_in_cfg + 4
    L = 16
    d_model = 32
    core = 64
    patch = [1, 4]
    pp = patch[1]
    pn = L // pp
    # The Pallas path implements exactly the [1, k] patch configuration.
    assert len(patch) == 2 and patch[0] == 1 and pp > 1 and L % pp == 0

    key = jax.random.PRNGKey(0)
    kx, kp = jax.random.split(key)
    x = jax.random.normal(kx, (B, L, C), jnp.float32)
    x_mark_enc = jnp.zeros((B, L, 4), jnp.float32)   # unused by the original forward

    params = init_params(kp, C, L, d_model, core, pp, pn)
    fused = fuse_params(params, B, C, L, d_model, core, pp, pn)
    forward = make_multiscale_mlp(fused, B, C, L, d_model)

    out = jax.block_until_ready(forward(x, x_mark_enc))
    ref = jax.block_until_ready(multiscale_mlp_ref(x, x_mark_enc, params, patch, d_model))

    assert out.shape == (B, d_model, C)
    assert bool(jnp.all(jnp.isfinite(out)))
    # Kernel matmuls use default TPU MXU precision (f32 accumulate); reference uses
    # Precision.HIGHEST, hence the loose tolerance.
    np.testing.assert_allclose(np.asarray(out), np.asarray(ref), rtol=2e-2, atol=2e-2)
    print("KERNEL_OK")
</pallas_src>

<mosaic_0001>
module attributes {stable_mosaic.version = 11 : i64} {
  func.func @_multiscale_mlp_kernel(%arg0: memref<16x16xf32, #tpu.memory_space<vmem>>, %arg1: memref<144x512xf32, #tpu.memory_space<vmem>>, %arg2: memref<288x32xf32, #tpu.memory_space<vmem>>, %arg3: memref<2x32x8xf32, #tpu.memory_space<vmem>>) attributes {dimension_semantics = [], scalar_prefetch = 0 : i64, scratch_operands = 0 : i64, tpu.core_type = #tpu.core_type<tc>} {
    %0 = tpu.iota {dimensions = array<i32: 1>} : vector<16x32xi32>
    %c16_i32 = arith.constant 16 : i32
    %1 = vector.broadcast %c16_i32 : i32 to vector<16x32xi32>
    %2 = arith.cmpi slt, %0, %1 : vector<16x32xi32>
    %c0 = arith.constant 0 : index
    %c0_0 = arith.constant 0 : index
    %3 = vector.load %arg0[%c0, %c0_0] : memref<16x16xf32, #tpu.memory_space<vmem>>, vector<16x16xf32>
    %c0_1 = arith.constant 0 : index
    %c0_2 = arith.constant 0 : index
    %4 = vector.load %arg2[%c0_1, %c0_2] : memref<288x32xf32, #tpu.memory_space<vmem>>, vector<16x32xf32>
    %cst = arith.constant dense<0.000000e+00> : vector<16x32xf32>
    %5 = tpu.matmul %3, %4, %cst {dimension_numbers = #tpu.dot_dimension_numbers<[1], [0], [0], [1], [0, 0, 1, 1], [], []>} : vector<16x16xf32>, vector<16x32xf32>, vector<16x32xf32> -> vector<16x32xf32>
    %c16 = arith.constant 16 : index
    %c0_3 = arith.constant 0 : index
    %6 = vector.load %arg2[%c16, %c0_3] : memref<288x32xf32, #tpu.memory_space<vmem>>, vector<1x32xf32>
    %c0_4 = arith.constant 0 : index
    %c0_5 = arith.constant 0 : index
    %7 = vector.load %arg1[%c0_4, %c0_5] : memref<144x512xf32, #tpu.memory_space<vmem>>, vector<32x512xf32>
    %c64 = arith.constant 64 : index
    %c0_6 = arith.constant 0 : index
    %8 = vector.load %arg1[%c64, %c0_6] : memref<144x512xf32, #tpu.memory_space<vmem>>, vector<1x512xf32>
    %c32 = arith.constant 32 : index
    %c0_7 = arith.constant 0 : index
    %9 = vector.load %arg1[%c32, %c0_7] : memref<144x512xf32, #tpu.memory_space<vmem>>, vector<32x512xf32>
    %c24 = arith.constant 24 : index
    %c0_8 = arith.constant 0 : index
    %10 = vector.load %arg2[%c24, %c0_8] : memref<288x32xf32, #tpu.memory_space<vmem>>, vector<1x32xf32>
    %11 = arith.mulf %5, %5 : vector<16x32xf32>
    %cst_9 = arith.constant dense<0.000000e+00> : vector<16xf32>
    %12 = vector.multi_reduction <add>, %11, %cst_9 [1] : vector<16x32xf32> to vector<16xf32>
    %13 = vector.shape_cast %12 : vector<16xf32> to vector<16x1xf32>
    %cst_10 = arith.constant 0.000000e+00 : f32
    %14 = vector.broadcast %cst_10 : f32 to vector<16x32xf32>
    %15 = arith.select %2, %11, %14 : vector<16x32xi1>, vector<16x32xf32>
    %cst_11 = arith.constant dense<0.000000e+00> : vector<16xf32>
    %16 = vector.multi_reduction <add>, %15, %cst_11 [1] : vector<16x32xf32> to vector<16xf32>
    %17 = vector.shape_cast %16 : vector<16xf32> to vector<16x1xf32>
    %cst_12 = arith.constant 6.250000e-02 : f32
    %18 = vector.broadcast %cst_12 : f32 to vector<16x1xf32>
    %19 = arith.mulf %17, %18 : vector<16x1xf32>
    %cst_13 = arith.constant 9.99999993E-9 : f32
    %20 = vector.broadcast %cst_13 : f32 to vector<16x1xf32>
    %21 = arith.addf %19, %20 : vector<16x1xf32>
    %22 = math.rsqrt %21 : vector<16x1xf32>
    %23 = arith.subf %13, %17 : vector<16x1xf32>
    %cst_14 = arith.constant 6.250000e-02 : f32
    %24 = vector.broadcast %cst_14 : f32 to vector<16x1xf32>
    %25 = arith.mulf %23, %24 : vector<16x1xf32>
    %cst_15 = arith.constant 9.99999993E-9 : f32
    %26 = vector.broadcast %cst_15 : f32 to vector<16x1xf32>
    %27 = arith.addf %25, %26 : vector<16x1xf32>
    %28 = math.rsqrt %27 : vector<16x1xf32>
    %29 = vector.broadcast %6 : vector<1x32xf32> to vector<16x32xf32>
    %30 = arith.mulf %29, %5 : vector<16x32xf32>
    %31 = vector.shape_cast %22 : vector<16x1xf32> to vector<16x1xf32>
    %32 = vector.broadcast %31 : vector<16x1xf32> to vector<16x32xf32>
    %33 = vector.shape_cast %28 : vector<16x1xf32> to vector<16x1xf32>
    %34 = vector.broadcast %33 : vector<16x1xf32> to vector<16x32xf32>
    %35 = arith.select %2, %32, %34 : vector<16x32xi1>, vector<16x32xf32>
    %36 = arith.mulf %30, %35 : vector<16x32xf32>
    %cst_16 = arith.constant dense<0.000000e+00> : vector<16x512xf32>
    %37 = tpu.matmul %36, %7, %cst_16 {dimension_numbers = #tpu.dot_dimension_numbers<[1], [0], [0], [1], [0, 0, 1, 1], [], []>} : vector<16x32xf32>, vector<32x512xf32>, vector<16x512xf32> -> vector<16x512xf32>
    %38 = vector.broadcast %8 : vector<1x512xf32> to vector<16x512xf32>
    %39 = arith.addf %37, %38 : vector<16x512xf32>
    %cst_17 = arith.constant 0.000000e+00 : f32
    %40 = vector.broadcast %cst_17 : f32 to vector<16x512xf32>
    %41 = arith.maximumf %39, %40 : vector<16x512xf32>
    %cst_18 = arith.constant dense<0.000000e+00> : vector<16x32xf32>
    %42 = tpu.matmul %41, %9, %cst_18 {dimension_numbers = #tpu.dot_dimension_numbers<[1], [1], [0], [0], [0, 0, 1, 0], [], []>} : vector<16x512xf32>, vector<32x512xf32>, vector<16x32xf32> -> vector<16x32xf32>
    %43 = vector.broadcast %10 : vector<1x32xf32> to vector<16x32xf32>
    %44 = arith.addf %42, %43 : vector<16x32xf32>
    %45 = arith.addf %5, %44 : vector<16x32xf32>
    %c32_19 = arith.constant 32 : index
    %c0_20 = arith.constant 0 : index
    %46 = vector.load %arg2[%c32_19, %c0_20] : memref<288x32xf32, #tpu.memory_space<vmem>>, vector<1x32xf32>
    %c72 = arith.constant 72 : index
    %c0_21 = arith.constant 0 : index
    %47 = vector.load %arg1[%c72, %c0_21] : memref<144x512xf32, #tpu.memory_space<vmem>>, vector<32x512xf32>
    %c136 = arith.constant 136 : index
    %c0_22 = arith.constant 0 : index
    %48 = vector.load %arg1[%c136, %c0_22] : memref<144x512xf32, #tpu.memory_space<vmem>>, vector<1x512xf32>
    %c104 = arith.constant 104 : index
    %c0_23 = arith.constant 0 : index
    %49 = vector.load %arg1[%c104, %c0_23] : memref<144x512xf32, #tpu.memory_space<vmem>>, vector<32x512xf32>
    %c40 = arith.constant 40 : index
    %c0_24 = arith.constant 0 : index
    %50 = vector.load %arg2[%c40, %c0_24] : memref<288x32xf32, #tpu.memory_space<vmem>>, vector<1x32xf32>
    %51 = arith.mulf %45, %45 : vector<16x32xf32>
    %cst_25 = arith.constant dense<0.000000e+00> : vector<16xf32>
    %52 = vector.multi_reduction <add>, %51, %cst_25 [1] : vector<16x32xf32> to vector<16xf32>
    %53 = vector.shape_cast %52 : vector<16xf32> to vector<16x1xf32>
    %cst_26 = arith.constant 0.000000e+00 : f32
    %54 = vector.broadcast %cst_26 : f32 to vector<16x32xf32>
    %55 = arith.select %2, %51, %54 : vector<16x32xi1>, vector<16x32xf32>
    %cst_27 = arith.constant dense<0.000000e+00> : vector<16xf32>
    %56 = vector.multi_reduction <add>, %55, %cst_27 [1] : vector<16x32xf32> to vector<16xf32>
    %57 = vector.shape_cast %56 : vector<16xf32> to vector<16x1xf32>
    %cst_28 = arith.constant 6.250000e-02 : f32
    %58 = vector.broadcast %cst_28 : f32 to vector<16x1xf32>
    %59 = arith.mulf %57, %58 : vector<16x1xf32>
    %cst_29 = arith.constant 9.99999993E-9 : f32
    %60 = vector.broadcast %cst_29 : f32 to vector<16x1xf32>
    %61 = arith.addf %59, %60 : vector<16x1xf32>
    %62 = math.rsqrt %61 : vector<16x1xf32>
    %63 = arith.subf %53, %57 : vector<16x1xf32>
    %cst_30 = arith.constant 6.250000e-02 : f32
    %64 = vector.broadcast %cst_30 : f32 to vector<16x1xf32>
    %65 = arith.mulf %63, %64 : vector<16x1xf32>
    %cst_31 = arith.constant 9.99999993E-9 : f32
    %66 = vector.broadcast %cst_31 : f32 to vector<16x1xf32>
    %67 = arith.addf %65, %66 : vector<16x1xf32>
    %68 = math.rsqrt %67 : vector<16x1xf32>
    %69 = vector.broadcast %46 : vector<1x32xf32> to vector<16x32xf32>
    %70 = arith.mulf %69, %45 : vector<16x32xf32>
    %71 = vector.shape_cast %62 : vector<16x1xf32> to vector<16x1xf32>
    %72 = vector.broadcast %71 : vector<16x1xf32> to vector<16x32xf32>
    %73 = vector.shape_cast %68 : vector<16x1xf32> to vector<16x1xf32>
    %74 = vector.broadcast %73 : vector<16x1xf32> to vector<16x32xf32>
    %75 = arith.select %2, %72, %74 : vector<16x32xi1>, vector<16x32xf32>
    %76 = arith.mulf %70, %75 : vector<16x32xf32>
    %cst_32 = arith.constant dense<0.000000e+00> : vector<16x512xf32>
    %77 = tpu.matmul %76, %47, %cst_32 {dimension_numbers = #tpu.dot_dimension_numbers<[1], [0], [0], [1], [0, 0, 1, 1], [], []>} : vector<16x32xf32>, vector<32x512xf32>, vector<16x512xf32> -> vector<16x512xf32>
    %78 = vector.broadcast %48 : vector<1x512xf32> to vector<16x512xf32>
    %79 = arith.addf %77, %78 : vector<16x512xf32>
    %cst_33 = arith.constant 0.000000e+00 : f32
    %80 = vector.broadcast %cst_33 : f32 to vector<16x512xf32>
    %81 = arith.maximumf %79, %80 : vector<16x512xf32>
    %cst_34 = arith.constant dense<0.000000e+00> : vector<16x32xf32>
    %82 = tpu.matmul %81, %49, %cst_34 {dimension_numbers = #tpu.dot_dimension_numbers<[1], [1], [0], [0], [0, 0, 1, 0], [], []>} : vector<16x512xf32>, vector<32x512xf32>, vector<16x32xf32> -> vector<16x32xf32>
    %83 = vector.broadcast %50 : vector<1x32xf32> to vector<16x32xf32>
    %84 = arith.addf %82, %83 : vector<16x32xf32>
    %85 = arith.addf %45, %84 : vector<16x32xf32>
    %86 = vector.extract_strided_slice %85 {offsets = [0, 0], sizes = [16, 16], strides = [1, 1]} : vector<16x32xf32> to vector<16x16xf32>
    %87 = vector.extract_strided_slice %85 {offsets = [0, 16], sizes = [16, 16], strides = [1, 1]} : vector<16x32xf32> to vector<16x16xf32>
    %88 = arith.addf %86, %87 : vector<16x16xf32>
    %c48 = arith.constant 48 : index
    %c0_35 = arith.constant 0 : index
    %89 = vector.load %arg2[%c48, %c0_35] : memref<288x32xf32, #tpu.memory_space<vmem>>, vector<16x16xf32>
    %c64_36 = arith.constant 64 : index
    %c0_37 = arith.constant 0 : index
    %90 = vector.load %arg2[%c64_36, %c0_37] : memref<288x32xf32, #tpu.memory_space<vmem>>, vector<16x16xf32>
    %c80 = arith.constant 80 : index
    %c0_38 = arith.constant 0 : index
    %91 = vector.load %arg2[%c80, %c0_38] : memref<288x32xf32, #tpu.memory_space<vmem>>, vector<16x32xf32>
    %c96 = arith.constant 96 : index
    %c0_39 = arith.constant 0 : index
    %92 = vector.load %arg2[%c96, %c0_39] : memref<288x32xf32, #tpu.memory_space<vmem>>, vector<1x32xf32>
    %c104_40 = arith.constant 104 : index
    %c0_41 = arith.constant 0 : index
    %93 = vector.load %arg2[%c104_40, %c0_41] : memref<288x32xf32, #tpu.memory_space<vmem>>, vector<32x16xf32>
    %c136_42 = arith.constant 136 : index
    %c0_43 = arith.constant 0 : index
    %94 = vector.load %arg2[%c136_42, %c0_43] : memref<288x32xf32, #tpu.memory_space<vmem>>, vector<1x16xf32>
    %95 = arith.mulf %3, %3 : vector<16x16xf32>
    %cst_44 = arith.constant dense<0.000000e+00> : vector<16x16xf32>
    %96 = tpu.matmul %89, %95, %cst_44 {dimension_numbers = #tpu.dot_dimension_numbers<[1], [0], [0], [1], [0, 0, 1, 1], [], []>} : vector<16x16xf32>, vector<16x16xf32>, vector<16x16xf32> -> vector<16x16xf32>
    %cst_45 = arith.constant dense<0.000000e+00> : vector<16xf32>
    %97 = vector.multi_reduction <add>, %96, %cst_45 [1] : vector<16x16xf32> to vector<16xf32>
    %98 = vector.shape_cast %97 : vector<16xf32> to vector<16x1xf32>
    %cst_46 = arith.constant 1.600000e+01 : f32
    %99 = vector.broadcast %cst_46 : f32 to vector<16x1xf32>
    %100 = arith.divf %98, %99 : vector<16x1xf32>
    %101 = arith.mulf %90, %3 : vector<16x16xf32>
    %cst_47 = arith.constant 9.99999993E-9 : f32
    %102 = vector.broadcast %cst_47 : f32 to vector<16x1xf32>
    %103 = arith.addf %100, %102 : vector<16x1xf32>
    %104 = math.rsqrt %103 : vector<16x1xf32>
    %105 = vector.broadcast %104 : vector<16x1xf32> to vector<16x16xf32>
    %106 = arith.mulf %101, %105 : vector<16x16xf32>
    %cst_48 = arith.constant dense<0.000000e+00> : vector<16x32xf32>
    %107 = tpu.matmul %106, %91, %cst_48 {dimension_numbers = #tpu.dot_dimension_numbers<[1], [0], [0], [1], [0, 0, 1, 1], [], []>} : vector<16x16xf32>, vector<16x32xf32>, vector<16x32xf32> -> vector<16x32xf32>
    %108 = vector.broadcast %92 : vector<1x32xf32> to vector<16x32xf32>
    %109 = arith.addf %107, %108 : vector<16x32xf32>
    %cst_49 = arith.constant 0.000000e+00 : f32
    %110 = vector.broadcast %cst_49 : f32 to vector<16x32xf32>
    %111 = arith.maximumf %109, %110 : vector<16x32xf32>
    %cst_50 = arith.constant dense<0.000000e+00> : vector<16x16xf32>
    %112 = tpu.matmul %111, %93, %cst_50 {dimension_numbers = #tpu.dot_dimension_numbers<[1], [0], [0], [1], [0, 0, 1, 1], [], []>} : vector<16x32xf32>, vector<32x16xf32>, vector<16x16xf32> -> vector<16x16xf32>
    %113 = vector.broadcast %94 : vector<1x16xf32> to vector<16x16xf32>
    %114 = arith.addf %112, %113 : vector<16x16xf32>
    %115 = arith.addf %114, %88 : vector<16x16xf32>
    %c144 = arith.constant 144 : index
    %c0_51 = arith.constant 0 : index
    %116 = vector.load %arg2[%c144, %c0_51] : memref<288x32xf32, #tpu.memory_space<vmem>>, vector<16x16xf32>
    %c160 = arith.constant 160 : index
    %c0_52 = arith.constant 0 : index
    %117 = vector.load %arg2[%c160, %c0_52] : memref<288x32xf32, #tpu.memory_space<vmem>>, vector<16x32xf32>
    %c176 = arith.constant 176 : index
    %c0_53 = arith.constant 0 : index
    %118 = vector.load %arg2[%c176, %c0_53] : memref<288x32xf32, #tpu.memory_space<vmem>>, vector<1x32xf32>
    %c184 = arith.constant 184 : index
    %c0_54 = arith.constant 0 : index
    %119 = vector.load %arg2[%c184, %c0_54] : memref<288x32xf32, #tpu.memory_space<vmem>>, vector<32x16xf32>
    %c216 = arith.constant 216 : index
    %c0_55 = arith.constant 0 : index
    %120 = vector.load %arg2[%c216, %c0_55] : memref<288x32xf32, #tpu.memory_space<vmem>>, vector<1x16xf32>
    %121 = arith.mulf %115, %115 : vector<16x16xf32>
    %cst_56 = arith.constant dense<0.000000e+00> : vector<16x16xf32>
    %122 = tpu.matmul %89, %121, %cst_56 {dimension_numbers = #tpu.dot_dimension_numbers<[1], [0], [0], [1], [0, 0, 1, 1], [], []>} : vector<16x16xf32>, vector<16x16xf32>, vector<16x16xf32> -> vector<16x16xf32>
    %cst_57 = arith.constant dense<0.000000e+00> : vector<16xf32>
    %123 = vector.multi_reduction <add>, %122, %cst_57 [1] : vector<16x16xf32> to vector<16xf32>
    %124 = vector.shape_cast %123 : vector<16xf32> to vector<16x1xf32>
    %cst_58 = arith.constant 1.600000e+01 : f32
    %125 = vector.broadcast %cst_58 : f32 to vector<16x1xf32>
    %126 = arith.divf %124, %125 : vector<16x1xf32>
    %127 = arith.mulf %116, %115 : vector<16x16xf32>
    %cst_59 = arith.constant 9.99999993E-9 : f32
    %128 = vector.broadcast %cst_59 : f32 to vector<16x1xf32>
    %129 = arith.addf %126, %128 : vector<16x1xf32>
    %130 = math.rsqrt %129 : vector<16x1xf32>
    %131 = vector.broadcast %130 : vector<16x1xf32> to vector<16x16xf32>
    %132 = arith.mulf %127, %131 : vector<16x16xf32>
    %cst_60 = arith.constant dense<0.000000e+00> : vector<16x32xf32>
    %133 = tpu.matmul %132, %117, %cst_60 {dimension_numbers = #tpu.dot_dimension_numbers<[1], [0], [0], [1], [0, 0, 1, 1], [], []>} : vector<16x16xf32>, vector<16x32xf32>, vector<16x32xf32> -> vector<16x32xf32>
    %134 = vector.broadcast %118 : vector<1x32xf32> to vector<16x32xf32>
    %135 = arith.addf %133, %134 : vector<16x32xf32>
    %cst_61 = arith.constant 0.000000e+00 : f32
    %136 = vector.broadcast %cst_61 : f32 to vector<16x32xf32>
    %137 = arith.maximumf %135, %136 : vector<16x32xf32>
    %cst_62 = arith.constant dense<0.000000e+00> : vector<16x16xf32>
    %138 = tpu.matmul %137, %119, %cst_62 {dimension_numbers = #tpu.dot_dimension_numbers<[1], [0], [0], [1], [0, 0, 1, 1], [], []>} : vector<16x32xf32>, vector<32x16xf32>, vector<16x16xf32> -> vector<16x16xf32>
    %139 = vector.broadcast %120 : vector<1x16xf32> to vector<16x16xf32>
    %140 = arith.addf %138, %139 : vector<16x16xf32>
    %141 = arith.addf %3, %140 : vector<16x16xf32>
    %c224 = arith.constant 224 : index
    %c0_63 = arith.constant 0 : index
    %142 = vector.load %arg2[%c224, %c0_63] : memref<288x32xf32, #tpu.memory_space<vmem>>, vector<32x16xf32>
    %c256 = arith.constant 256 : index
    %c0_64 = arith.constant 0 : index
    %143 = vector.load %arg2[%c256, %c0_64] : memref<288x32xf32, #tpu.memory_space<vmem>>, vector<32x1xf32>
    %144 = vector.extract_strided_slice %141 {offsets = [0, 0], sizes = [8, 16], strides = [1, 1]} : vector<16x16xf32> to vector<8x16xf32>
    %cst_65 = arith.constant dense<0.000000e+00> : vector<32x8xf32>
    %145 = tpu.matmul %142, %144, %cst_65 {dimension_numbers = #tpu.dot_dimension_numbers<[1], [1], [0], [0], [0, 0, 1, 0], [], []>} : vector<32x16xf32>, vector<8x16xf32>, vector<32x8xf32> -> vector<32x8xf32>
    %146 = vector.broadcast %143 : vector<32x1xf32> to vector<32x8xf32>
    %147 = arith.addf %145, %146 : vector<32x8xf32>
    %c0_66 = arith.constant 0 : index
    %c0_67 = arith.constant 0 : index
    %c0_68 = arith.constant 0 : index
    %148 = vector.load %arg3[%c0_66, %c0_67, %c0_68] : memref<2x32x8xf32, #tpu.memory_space<vmem>>, vector<1x32x8xf32>
    %149 = vector.shape_cast %148 : vector<1x32x8xf32> to vector<32x8xf32>
    %150 = vector.shape_cast %147 : vector<32x8xf32> to vector<1x32x8xf32>
    tpu.vector_store %arg3[%c0_66, %c0_67, %c0_68], %150 {strides = array<i32>} : memref<2x32x8xf32, #tpu.memory_space<vmem>>, vector<1x32x8xf32>,
    %151 = vector.extract_strided_slice %141 {offsets = [8, 0], sizes = [8, 16], strides = [1, 1]} : vector<16x16xf32> to vector<8x16xf32>
    %cst_69 = arith.constant dense<0.000000e+00> : vector<32x8xf32>
    %152 = tpu.matmul %142, %151, %cst_69 {dimension_numbers = #tpu.dot_dimension_numbers<[1], [1], [0], [0], [0, 0, 1, 0], [], []>} : vector<32x16xf32>, vector<8x16xf32>, vector<32x8xf32> -> vector<32x8xf32>
    %153 = vector.broadcast %143 : vector<32x1xf32> to vector<32x8xf32>
    %154 = arith.addf %152, %153 : vector<32x8xf32>
    %c1 = arith.constant 1 : index
    %c0_70 = arith.constant 0 : index
    %c0_71 = arith.constant 0 : index
    %155 = vector.load %arg3[%c1, %c0_70, %c0_71] : memref<2x32x8xf32, #tpu.memory_space<vmem>>, vector<1x32x8xf32>
    %156 = vector.shape_cast %155 : vector<1x32x8xf32> to vector<32x8xf32>
    %157 = vector.shape_cast %154 : vector<32x8xf32> to vector<1x32x8xf32>
    tpu.vector_store %arg3[%c1, %c0_70, %c0_71], %157 {strides = array<i32>} : memref<2x32x8xf32, #tpu.memory_space<vmem>>, vector<1x32x8xf32>,
    return
  }
}

</mosaic_0001>

<llo_original>
// kernel: forward.2
$region0: #{forward.2}
  #allocation0 [shape = 'u32[]', space=smem, size = 0x4, offset = 0x4, fixed_abs, tag = 'smem constant byte address 0x4 - core index']
  #allocation1 [shape = 'u32[144,128]{1,0:T(1,128)}', space=vmem, size = 0x12000, scoped, tag = 'internal scratch']
  %s0 = inlined_call_operand.hbm [shape: f32[144,512], index: 0, kind: input, shape index: {}]
  %s1 = inlined_call_operand.hbm [shape: f32[288,32], index: 1, kind: input, shape index: {}]
  %s2 = inlined_call_operand.vmem [shape: f32[2,16,8], index: 2, kind: input, shape index: {}]
  %s3 = inlined_call_operand.vmem [shape: f32[2,32,8], index: 3, kind: output, shape index: {}]
  %s4 = sld [smem:[#allocation0]]
  $region30: #{forward.2} parent=0
    _
  %s6 = ssub.s32 1, %s4
  %s7 = scalar_select 0, %s6, %s4
  $region1: #{forward.2} parent=0
    #allocation2 [shape = 'u8[294912]{0}', space=vmem, size = 0x48000, scoped, tag = 'input window, operand 1, single buffered']
    #allocation3 [shape = 's32[1]{0}', space=sflag, size = 0x4, scoped, tag = 'scoped memory for forward.2']
    #allocation4 [shape = 'u8[147456]{0}', space=vmem, size = 0x24000, scoped, tag = 'input window, operand 2, single buffered']
    #allocation5 [shape = 's32[1]{0}', space=sflag, size = 0x4, scoped, tag = 'scoped memory for forward.2']
    #allocation6 [shape = 'u8[8192]{0}', space=vmem, size = 0x2000, dematerialized = true, scoped, tag = 'FusionAdapter Buffer %fusion.1 = f32[16,16]{1,0:T(8,128)} fusion(%param_2.1), kind=kLoop, calls=%fused_computation.1.clone, metadata={op_name="jit(forward)/reshape" stack_frame_id=7}']
    %8 = vsyncpa [#allocation3], 0
    %9 = vsyncpa [#allocation5], 0
    // Predicated region
    $region2: #{forward.2} parent=1 // pred_check
      _
    $region3: #{forward.2} parent=1 // pred_check_branch
      %11 = sbr.rel (0) target = $region5
    $region4: #{forward.2} parent=1 // pred_region
      _
    $region5: #{forward.2} parent=1 // pred_fallthru
      _
    // Predicated region
    $region6: #{forward.2} parent=1 // pred_check
      _
    $region7: #{forward.2} parent=1 // pred_check_branch
      %13 = sbr.rel (0) target = $region9
    $region8: #{forward.2} parent=1 // pred_region
      %s15 = ssub.s32 9216, 9216
      %16 = vsyncadd [#allocation3], %s15
      %s17 = sshll.u32 [#allocation2], 4
      %s18 = int_to_ptr.vmem [resolvable:$true] %s17
      %23 = dma.hbm_to_vmem [thread:$0]  %s0, 9216, %s18, [#allocation3], 512, 512, 32
    $region9: #{forward.2} parent=1 // pred_fallthru
      _
    // Predicated region
    $region10: #{forward.2} parent=1 // pred_check
      _
    $region11: #{forward.2} parent=1 // pred_check_branch
      %25 = sbr.rel (0) target = $region13
    $region12: #{forward.2} parent=1 // pred_region
      %s27 = ssub.s32 4608, 4608
      %28 = vsyncadd [#allocation5], %s27
      %s29 = sshll.u32 [#allocation4], 4
      %s30 = int_to_ptr.vmem [resolvable:$true] %s29
      %35 = dma.hbm_to_vmem [thread:$0]  %s1, 4608, %s30, [#allocation5], 128, 128, 8
    $region13: #{forward.2} parent=1 // pred_fallthru
      _
    // Predicated region
    $region14: #{forward.2} parent=1 // pred_check
      _
    $region15: #{forward.2} parent=1 // pred_check_branch
      %37 = sbr.rel (0) target = $region17
    $region16: #{forward.2} parent=1 // pred_region
      %38 = dma.done [#allocation3], 9216
    $region17: #{forward.2} parent=1 // pred_fallthru
      _
    // Predicated region
    $region18: #{forward.2} parent=1 // pred_check
      _
    $region19: #{forward.2} parent=1 // pred_check_branch
      %40 = sbr.rel (0) target = $region21
    $region20: #{forward.2} parent=1 // pred_region
      %41 = dma.done [#allocation5], 4608
    $region21: #{forward.2} parent=1 // pred_fallthru
      _
    %v42 = vld [vmem:[%s2] sm:$0xff]
    %s44 = ssub.s32 256, 1
    %45 = vst [vmem:[#allocation6] sm:%s44] %v42
    %s46 = scalar_lea.vmem %s2, 8
    %v47 = vld [vmem:[%s46] sm:$0xff]
    %s48 = scalar_lea.vmem [#allocation6], 8
    %s50 = ssub.s32 256, 1
    %51 = vst [vmem:[%s48] sm:%s50] %v47
    %v52 = vlaneseq
    %v53 = vand.u32 %v52, 127
    %vm54 = vcmp.lt.s32.totalorder %v53, 16
    %v55 = vld [vmem:[#allocation6] sm:$0xff]
    %v56 = vld [vmem:[#allocation6 + $0x8] sm:$0xff]
    %v57 = vld [vmem:[#allocation4] sm:$0xff]
    %v58 = vld [vmem:[#allocation4 + $0x8] sm:$0xff]
    %vm59 = vcmask 130048
    %v61 = vsel %vm59, %v55, 0
    %v64 = vsel %vm59, %v56, 0
    %66 = vmatprep.subr.mxu0 0.0
    %67 = vmatpush1.msra.mxu0 0.0
    %68 = vmatprep.subr.mxu0 0.0
    %69 = vmatpush1.msra.mxu0 0.0
    %70 = vmatprep.subr.mxu0 0.0
    %71 = vmatpush1.msra.mxu0 0.0
    %72 = vmatprep.subr.mxu0 0.0
    %73 = vmatpush1.msra.mxu0 0.0
    %74 = vmatprep.subr.mxu0 0.0
    %75 = vmatpush1.msra.mxu0 0.0
    %76 = vmatprep.subr.mxu0 0.0
    %77 = vmatpush1.msra.mxu0 0.0
    %78 = vmatprep.subr.mxu0 0.0
    %79 = vmatpush1.msra.mxu0 0.0
    %80 = vmatprep.subr.mxu0 0.0
    %81 = vmatpush1.msra.mxu0 0.0
    %82 = vmatprep.subr.mxu0 0.0
    %83 = vmatpush1.msra.mxu0 0.0
    %84 = vmatprep.subr.mxu0 0.0
    %85 = vmatpush1.msra.mxu0 0.0
    %86 = vmatprep.subr.mxu0 0.0
    %87 = vmatpush1.msra.mxu0 0.0
    %88 = vmatprep.subr.mxu0 0.0
    %89 = vmatpush1.msra.mxu0 0.0
    %90 = vmatprep.subr.mxu0 0.0
    %91 = vmatpush1.msra.mxu0 0.0
    %92 = vmatprep.subr.mxu0 0.0
    %93 = vmatpush1.msra.mxu0 0.0
    %94 = vmatprep.subr.mxu0 0.0
    %95 = vmatpush1.msra.mxu0 %v58
    %96 = vmatprep.subr.mxu0 0.0
    %97 = vmatpush1.msra.mxu0 %v57
    %98 = vmatprep.subr.mxu0 0.0
    %99 = vmatpush2.msra.mxu0 0.0
    %100 = vmatprep.subr.mxu0 0.0
    %101 = vmatpush2.msra.mxu0 0.0
    %102 = vmatprep.subr.mxu0 0.0
    %103 = vmatpush2.msra.mxu0 0.0
    %104 = vmatprep.subr.mxu0 0.0
    %105 = vmatpush2.msra.mxu0 0.0
    %106 = vmatprep.subr.mxu0 0.0
    %107 = vmatpush2.msra.mxu0 0.0
    %108 = vmatprep.subr.mxu0 0.0
    %109 = vmatpush2.msra.mxu0 0.0
    %110 = vmatprep.subr.mxu0 0.0
    %111 = vmatpush2.msra.mxu0 0.0
    %112 = vmatprep.subr.mxu0 0.0
    %113 = vmatpush2.msra.mxu0 0.0
    %114 = vmatprep.subr.mxu0 0.0
    %115 = vmatpush2.msra.mxu0 0.0
    %116 = vmatprep.subr.mxu0 0.0
    %117 = vmatpush2.msra.mxu0 0.0
    %118 = vmatprep.subr.mxu0 0.0
    %119 = vmatpush2.msra.mxu0 0.0
    %120 = vmatprep.subr.mxu0 0.0
    %121 = vmatpush2.msra.mxu0 0.0
    %122 = vmatprep.subr.mxu0 0.0
    %123 = vmatpush2.msra.mxu0 0.0
    %124 = vmatprep.subr.mxu0 0.0
    %125 = vmatpush2.msra.mxu0 0.0
    %126 = vmatprep.subr.mxu0 0.0
    %127 = vmatpush2.msra.mxu0 0.0
    %128 = vmatprep.subr.mxu0 0.0
    %129 = vmatpush2.msra.mxu0 0.0
    %130 = vmatprep.mubr.f32.mxu0 0.0
    %131 = vmatmul.mubr.f32.gmra.mxu0 %v61
    %v132 = vpop.f32.mrf.mxu0
    %v133 = vadd.f32 0.0, %v132
    %v134 = vpop.f32.mrf.mxu0
    %135 = vmatprep.mubr.f32.mxu0 0.0
    %136 = vmatmul.mubr.f32.gmra.mxu0 %v64
    %v137 = vpop.f32.mrf.mxu0
    %v138 = vadd.f32 0.0, %v137
    %v139 = vpop.f32.mrf.mxu0
    %140 = vdwg.mxu0
    %v141 = vld [vmem:[#allocation4 + $0x10] sm:$0x1]
    %v142 = vld [vmem:[#allocation2] sm:$0xff]
    %v143 = vld [vmem:[#allocation2 + $0x8] sm:$0xff]
    %v144 = vld [vmem:[#allocation2 + $0x10] sm:$0xff]
    %v145 = vld [vmem:[#allocation2 + $0x18] sm:$0xff]
    %v146 = vld [vmem:[#allocation2 + $0x20] sm:$0xff]
    %v147 = vld [vmem:[#allocation2 + $0x28] sm:$0xff]
    %v148 = vld [vmem:[#allocation2 + $0x30] sm:$0xff]
    %v149 = vld [vmem:[#allocation2 + $0x38] sm:$0xff]
    %v150 = vld [vmem:[#allocation2 + $0x40] sm:$0xff]
    %v151 = vld [vmem:[#allocation2 + $0x48] sm:$0xff]
    %v152 = vld [vmem:[#allocation2 + $0x50] sm:$0xff]
    %v153 = vld [vmem:[#allocation2 + $0x58] sm:$0xff]
    %v154 = vld [vmem:[#allocation2 + $0x60] sm:$0xff]
    %v155 = vld [vmem:[#allocation2 + $0x68] sm:$0xff]
    %v156 = vld [vmem:[#allocation2 + $0x70] sm:$0xff]
    %v157 = vld [vmem:[#allocation2 + $0x78] sm:$0xff]
    %s158 = scalar_lea.vmem [#allocation2], 256
    %v159 = vld [vmem:[%s158] ss:$8 sm:$0xf]
    %v160 = vld [vmem:[#allocation2 + $0x80] sm:$0xff]
    %v161 = vld [vmem:[#allocation2 + $0x88] sm:$0xff]
    %v162 = vld [vmem:[#allocation2 + $0x90] sm:$0xff]
    %v163 = vld [vmem:[#allocation2 + $0x98] sm:$0xff]
    %v164 = vld [vmem:[#allocation2 + $0xa0] sm:$0xff]
    %v165 = vld [vmem:[#allocation2 + $0xa8] sm:$0xff]
    %v166 = vld [vmem:[#allocation2 + $0xb0] sm:$0xff]
    %v167 = vld [vmem:[#allocation2 + $0xb8] sm:$0xff]
    %v168 = vld [vmem:[#allocation2 + $0xc0] sm:$0xff]
    %v169 = vld [vmem:[#allocation2 + $0xc8] sm:$0xff]
    %v170 = vld [vmem:[#allocation2 + $0xd0] sm:$0xff]
    %v171 = vld [vmem:[#allocation2 + $0xd8] sm:$0xff]
    %v172 = vld [vmem:[#allocation2 + $0xe0] sm:$0xff]
    %v173 = vld [vmem:[#allocation2 + $0xe8] sm:$0xff]
    %v174 = vld [vmem:[#allocation2 + $0xf0] sm:$0xff]
    %v175 = vld [vmem:[#allocation2 + $0xf8] sm:$0xff]
    %v176 = vld [vmem:[#allocation4 + $0x18] sm:$0x1]
    %v177 = vmul.f32 %v133, %v133
    %v178 = vmul.f32 %v138, %v138
    %vm179 = vcmask 261120
    %v180 = vsel %vm179, %v177, 0.0
    %181 = vadd.xlane.f32.xlu0 %v180
    %v182 = vpop.xlane.xlu0 %181
    %v183 = vsel %vm179, %v178, 0.0
    %184 = vadd.xlane.f32.xlu0 %v183
    %v185 = vpop.xlane.xlu0 %184
    %v186 = vsel %vm54, %v177, 0.0
    %v187 = vsel %vm54, %v178, 0.0
    %v188 = vsel %vm179, %v186, 0.0
    %189 = vadd.xlane.f32.xlu0 %v188
    %v190 = vpop.xlane.xlu0 %189
    %v191 = vsel %vm179, %v187, 0.0
    %192 = vadd.xlane.f32.xlu0 %v191
    %v193 = vpop.xlane.xlu0 %192
    %v194 = vmul.f32 %v190, 0.0625
    %v195 = vmul.f32 %v193, 0.0625
    %v196 = vadd.f32 %v194, 1e-08
    %v197 = vadd.f32 %v195, 1e-08
    %v198 = vrsqrt.pop %v196
    %v199 = vrsqrt.pop %v197
    %v200 = vsub.f32 %v182, %v190
    %v201 = vsub.f32 %v185, %v193
    %v202 = vmul.f32 %v200, 0.0625
    %v203 = vmul.f32 %v201, 0.0625
    %v204 = vadd.f32 %v202, 1e-08
    %v205 = vadd.f32 %v203, 1e-08
    %v206 = vrsqrt.pop %v204
    %v207 = vrsqrt.pop %v205
    %v208 = vlaneseq
    %v209 = vshrl.u32 %v208, 7
    %v210 = vsub.s32 0, %v209
    %v211 = vrot.slane %v141, %v210
    %v212 = vmul.f32 %v211, %v133
    %v213 = vmul.f32 %v211, %v138
    %v214 = vsel %vm54, %v198, %v206
    %v215 = vsel %vm54, %v199, %v207
    %v216 = vmul.f32 %v212, %v214
    %v217 = vmul.f32 %v213, %v215
    %v219 = vlaneseq
    %v220 = vshrl.u32 %v219, 7
    %v221 = vsub.s32 0, %v220
    %v222 = vrot.slane %v159, %v221
    %v223 = vlaneseq
    %v224 = vshrl.u32 %v223, 7
    %v225 = vsub.s32 1, %v224
    %v226 = vrot.slane %v159, %v225
    %v227 = vlaneseq
    %v228 = vshrl.u32 %v227, 7
    %v229 = vsub.s32 2, %v228
    %v230 = vrot.slane %v159, %v229
    %v231 = vlaneseq
    %v232 = vshrl.u32 %v231, 7
    %v233 = vsub.s32 3, %v232
    %v234 = vrot.slane %v159, %v233
    %v240 = vsel %vm179, %v216, 0
    %v243 = vsel %vm179, %v217, 0
    %245 = vmatprep.subr.mxu0 0.0
    %246 = vmatpush1.msra.mxu0 0.0
    %247 = vmatprep.subr.mxu0 0.0
    %248 = vmatpush1.msra.mxu0 0.0
    %249 = vmatprep.subr.mxu0 0.0
    %250 = vmatpush1.msra.mxu0 0.0
    %251 = vmatprep.subr.mxu0 0.0
    %252 = vmatpush1.msra.mxu0 0.0
    %253 = vmatprep.subr.mxu0 0.0
    %254 = vmatpush1.msra.mxu0 0.0
    %255 = vmatprep.subr.mxu0 0.0
    %256 = vmatpush1.msra.mxu0 0.0
    %257 = vmatprep.subr.mxu0 0.0
    %258 = vmatpush1.msra.mxu0 0.0
    %259 = vmatprep.subr.mxu0 0.0
    %260 = vmatpush1.msra.mxu0 0.0
    %261 = vmatprep.subr.mxu0 0.0
    %262 = vmatpush1.msra.mxu0 0.0
    %263 = vmatprep.subr.mxu0 0.0
    %264 = vmatpush1.msra.mxu0 0.0
    %265 = vmatprep.subr.mxu0 0.0
    %266 = vmatpush1.msra.mxu0 0.0
    %267 = vmatprep.subr.mxu0 0.0
    %268 = vmatpush1.msra.mxu0 0.0
    %269 = vmatprep.subr.mxu0 %v155
    %270 = vmatpush1.msra.mxu0 %v154
    %271 = vmatprep.subr.mxu0 %v151
    %272 = vmatpush1.msra.mxu0 %v150
    %273 = vmatprep.subr.mxu0 %v147
    %274 = vmatpush1.msra.mxu0 %v146
    %275 = vmatprep.subr.mxu0 %v143
    %276 = vmatpush1.msra.mxu0 %v142
    %277 = vmatprep.subr.mxu0 0.0
    %278 = vmatpush2.msra.mxu0 0.0
    %279 = vmatprep.subr.mxu0 0.0
    %280 = vmatpush2.msra.mxu0 0.0
    %281 = vmatprep.subr.mxu0 0.0
    %282 = vmatpush2.msra.mxu0 0.0
    %283 = vmatprep.subr.mxu0 0.0
    %284 = vmatpush2.msra.mxu0 0.0
    %285 = vmatprep.subr.mxu0 0.0
    %286 = vmatpush2.msra.mxu0 0.0
    %287 = vmatprep.subr.mxu0 0.0
    %288 = vmatpush2.msra.mxu0 0.0
    %289 = vmatprep.subr.mxu0 0.0
    %290 = vmatpush2.msra.mxu0 0.0
    %291 = vmatprep.subr.mxu0 0.0
    %292 = vmatpush2.msra.mxu0 0.0
    %293 = vmatprep.subr.mxu0 0.0
    %294 = vmatpush2.msra.mxu0 0.0
    %295 = vmatprep.subr.mxu0 0.0
    %296 = vmatpush2.msra.mxu0 0.0
    %297 = vmatprep.subr.mxu0 0.0
    %298 = vmatpush2.msra.mxu0 0.0
    %299 = vmatprep.subr.mxu0 0.0
    %300 = vmatpush2.msra.mxu0 0.0
    %301 = vmatprep.subr.mxu0 0.0
    %302 = vmatpush2.msra.mxu0 0.0
    %303 = vmatprep.subr.mxu0 0.0
    %304 = vmatpush2.msra.mxu0 0.0
    %305 = vmatprep.subr.mxu0 0.0
    %306 = vmatpush2.msra.mxu0 0.0
    %307 = vmatprep.subr.mxu0 0.0
    %308 = vmatpush2.msra.mxu0 0.0
    %309 = vmatprep.mubr.f32.mxu0 0.0
    %310 = vmatmul.mubr.f32.gmra.mxu0 %v240
    %v311 = vpop.f32.mrf.mxu0
    %v312 = vadd.f32 %v222, %v311
    %v313 = vpop.f32.mrf.mxu0
    %v314 = vadd.f32 %v226, %v313
    %315 = vmatprep.mubr.f32.mxu0 0.0
    %316 = vmatmul.mubr.f32.gmra.mxu0 %v243
    %v317 = vpop.f32.mrf.mxu0
    %v318 = vadd.f32 %v222, %v317
    %v319 = vpop.f32.mrf.mxu0
    %v320 = vadd.f32 %v226, %v319
    %321 = vdwg.mxu0
    %322 = vmatprep.subr.mxu0 0.0
    %323 = vmatpush1.msra.mxu0 0.0
    %324 = vmatprep.subr.mxu0 0.0
    %325 = vmatpush1.msra.mxu0 0.0
    %326 = vmatprep.subr.mxu0 0.0
    %327 = vmatpush1.msra.mxu0 0.0
    %328 = vmatprep.subr.mxu0 0.0
    %329 = vmatpush1.msra.mxu0 0.0
    %330 = vmatprep.subr.mxu0 0.0
    %331 = vmatpush1.msra.mxu0 0.0
    %332 = vmatprep.subr.mxu0 0.0
    %333 = vmatpush1.msra.mxu0 0.0
    %334 = vmatprep.subr.mxu0 0.0
    %335 = vmatpush1.msra.mxu0 0.0
    %336 = vmatprep.subr.mxu0 0.0
    %337 = vmatpush1.msra.mxu0 0.0
    %338 = vmatprep.subr.mxu0 0.0
    %339 = vmatpush1.msra.mxu0 0.0
    %340 = vmatprep.subr.mxu0 0.0
    %341 = vmatpush1.msra.mxu0 0.0
    %342 = vmatprep.subr.mxu0 0.0
    %343 = vmatpush1.msra.mxu0 0.0
    %344 = vmatprep.subr.mxu0 0.0
    %345 = vmatpush1.msra.mxu0 0.0
    %346 = vmatprep.subr.mxu0 %v157
    %347 = vmatpush1.msra.mxu0 %v156
    %348 = vmatprep.subr.mxu0 %v153
    %349 = vmatpush1.msra.mxu0 %v152
    %350 = vmatprep.subr.mxu0 %v149
    %351 = vmatpush1.msra.mxu0 %v148
    %352 = vmatprep.subr.mxu0 %v145
    %353 = vmatpush1.msra.mxu0 %v144
    %354 = vmatprep.subr.mxu0 0.0
    %355 = vmatpush2.msra.mxu0 0.0
    %356 = vmatprep.subr.mxu0 0.0
    %357 = vmatpush2.msra.mxu0 0.0
    %358 = vmatprep.subr.mxu0 0.0
    %359 = vmatpush2.msra.mxu0 0.0
    %360 = vmatprep.subr.mxu0 0.0
    %361 = vmatpush2.msra.mxu0 0.0
    %362 = vmatprep.subr.mxu0 0.0
    %363 = vmatpush2.msra.mxu0 0.0
    %364 = vmatprep.subr.mxu0 0.0
    %365 = vmatpush2.msra.mxu0 0.0
    %366 = vmatprep.subr.mxu0 0.0
    %367 = vmatpush2.msra.mxu0 0.0
    %368 = vmatprep.subr.mxu0 0.0
    %369 = vmatpush2.msra.mxu0 0.0
    %370 = vmatprep.subr.mxu0 0.0
    %371 = vmatpush2.msra.mxu0 0.0
    %372 = vmatprep.subr.mxu0 0.0
    %373 = vmatpush2.msra.mxu0 0.0
    %374 = vmatprep.subr.mxu0 0.0
    %375 = vmatpush2.msra.mxu0 0.0
    %376 = vmatprep.subr.mxu0 0.0
    %377 = vmatpush2.msra.mxu0 0.0
    %378 = vmatprep.subr.mxu0 0.0
    %379 = vmatpush2.msra.mxu0 0.0
    %380 = vmatprep.subr.mxu0 0.0
    %381 = vmatpush2.msra.mxu0 0.0
    %382 = vmatprep.subr.mxu0 0.0
    %383 = vmatpush2.msra.mxu0 0.0
    %384 = vmatprep.subr.mxu0 0.0
    %385 = vmatpush2.msra.mxu0 0.0
    %386 = vmatprep.mubr.f32.mxu0 0.0
    %387 = vmatmul.mubr.f32.gmra.mxu0 %v240
    %v388 = vpop.f32.mrf.mxu0
    %v389 = vadd.f32 %v230, %v388
    %v390 = vpop.f32.mrf.mxu0
    %v391 = vadd.f32 %v234, %v390
    %392 = vmatprep.mubr.f32.mxu0 0.0
    %393 = vmatmul.mubr.f32.gmra.mxu0 %v243
    %v394 = vpop.f32.mrf.mxu0
    %v395 = vadd.f32 %v230, %v394
    %v396 = vpop.f32.mrf.mxu0
    %v397 = vadd.f32 %v234, %v396
    %398 = vdwg.mxu0
    %v399 = vmax.f32 %v312, 0.0
    %v400 = vmax.f32 %v314, 0.0
    %v401 = vmax.f32 %v389, 0.0
    %v402 = vmax.f32 %v391, 0.0
    %v403 = vmax.f32 %v318, 0.0
    %v404 = vmax.f32 %v320, 0.0
    %v405 = vmax.f32 %v395, 0.0
    %v406 = vmax.f32 %v397, 0.0
    %v407 = vlaneseq
    %v408 = vshrl.u32 %v407, 7
    %v409 = vsub.s32 0, %v408
    %v410 = vrot.slane %v176, %v409
    %411 = vmatprep.subr.mxu0 0.0
    %412 = vmatpush1.xpose.msra.mxu0 0.0
    %413 = vmatprep.subr.mxu0 0.0
    %414 = vmatpush1.xpose.msra.mxu0 0.0
    %415 = vmatprep.subr.mxu0 0.0
    %416 = vmatpush1.xpose.msra.mxu0 0.0
    %417 = vmatprep.subr.mxu0 0.0
    %418 = vmatpush1.xpose.msra.mxu0 0.0
    %419 = vmatprep.subr.mxu0 0.0
    %420 = vmatpush1.xpose.msra.mxu0 0.0
    %421 = vmatprep.subr.mxu0 0.0
    %422 = vmatpush1.xpose.msra.mxu0 0.0
    %423 = vmatprep.subr.mxu0 0.0
    %424 = vmatpush1.xpose.msra.mxu0 0.0
    %425 = vmatprep.subr.mxu0 0.0
    %426 = vmatpush1.xpose.msra.mxu0 0.0
    %427 = vmatprep.subr.mxu0 0.0
    %428 = vmatpush1.xpose.msra.mxu0 0.0
    %429 = vmatprep.subr.mxu0 0.0
    %430 = vmatpush1.xpose.msra.mxu0 0.0
    %431 = vmatprep.subr.mxu0 0.0
    %432 = vmatpush1.xpose.msra.mxu0 0.0
    %433 = vmatprep.subr.mxu0 0.0
    %434 = vmatpush1.xpose.msra.mxu0 0.0
    %435 = vmatprep.subr.mxu0 %v173
    %436 = vmatpush1.xpose.msra.mxu0 %v172
    %437 = vmatprep.subr.mxu0 %v169
    %438 = vmatpush1.xpose.msra.mxu0 %v168
    %439 = vmatprep.subr.mxu0 %v165
    %440 = vmatpush1.xpose.msra.mxu0 %v164
    %441 = vmatprep.subr.mxu0 %v161
    %442 = vmatpush1.xpose.msra.mxu0 %v160
    %443 = vmatprep.subr.mxu0 0.0
    %444 = vmatpush2.xpose.msra.mxu0 0.0
    %445 = vmatprep.subr.mxu0 0.0
    %446 = vmatpush2.xpose.msra.mxu0 0.0
    %447 = vmatprep.subr.mxu0 0.0
    %448 = vmatpush2.xpose.msra.mxu0 0.0
    %449 = vmatprep.subr.mxu0 0.0
    %450 = vmatpush2.xpose.msra.mxu0 0.0
    %451 = vmatprep.subr.mxu0 0.0
    %452 = vmatpush2.xpose.msra.mxu0 0.0
    %453 = vmatprep.subr.mxu0 0.0
    %454 = vmatpush2.xpose.msra.mxu0 0.0
    %455 = vmatprep.subr.mxu0 0.0
    %456 = vmatpush2.xpose.msra.mxu0 0.0
    %457 = vmatprep.subr.mxu0 0.0
    %458 = vmatpush2.xpose.msra.mxu0 0.0
    %459 = vmatprep.subr.mxu0 0.0
    %460 = vmatpush2.xpose.msra.mxu0 0.0
    %461 = vmatprep.subr.mxu0 0.0
    %462 = vmatpush2.xpose.msra.mxu0 0.0
    %463 = vmatprep.subr.mxu0 0.0
    %464 = vmatpush2.xpose.msra.mxu0 0.0
    %465 = vmatprep.subr.mxu0 0.0
    %466 = vmatpush2.xpose.msra.mxu0 0.0
    %467 = vmatprep.subr.mxu0 0.0
    %468 = vmatpush2.xpose.msra.mxu0 0.0
    %469 = vmatprep.subr.mxu0 0.0
    %470 = vmatpush2.xpose.msra.mxu0 0.0
    %471 = vmatprep.subr.mxu0 0.0
    %472 = vmatpush2.xpose.msra.mxu0 0.0
    %473 = vmatprep.subr.mxu0 0.0
    %474 = vmatpush2.xpose.msra.mxu0 0.0
    %475 = vmatprep.mubr.f32.mxu0 %v400
    %476 = vmatmul.mubr.f32.gmra.mxu0 %v399
    %v477 = vpop.f32.mrf.mxu0
    %v478 = vadd.f32 %v410, %v477
    %v479 = vpop.f32.mrf.mxu0
    %480 = vmatprep.mubr.f32.mxu0 %v404
    %481 = vmatmul.mubr.f32.gmra.mxu0 %v403
    %v482 = vpop.f32.mrf.mxu0
    %v483 = vadd.f32 %v410, %v482
    %v484 = vpop.f32.mrf.mxu0
    %485 = vdwg.mxu0
    %486 = vmatprep.subr.mxu0 0.0
    %487 = vmatpush1.xpose.msra.mxu0 0.0
    %488 = vmatprep.subr.mxu0 0.0
    %489 = vmatpush1.xpose.msra.mxu0 0.0
    %490 = vmatprep.subr.mxu0 0.0
    %491 = vmatpush1.xpose.msra.mxu0 0.0
    %492 = vmatprep.subr.mxu0 0.0
    %493 = vmatpush1.xpose.msra.mxu0 0.0
    %494 = vmatprep.subr.mxu0 0.0
    %495 = vmatpush1.xpose.msra.mxu0 0.0
    %496 = vmatprep.subr.mxu0 0.0
    %497 = vmatpush1.xpose.msra.mxu0 0.0
    %498 = vmatprep.subr.mxu0 0.0
    %499 = vmatpush1.xpose.msra.mxu0 0.0
    %500 = vmatprep.subr.mxu0 0.0
    %501 = vmatpush1.xpose.msra.mxu0 0.0
    %502 = vmatprep.subr.mxu0 0.0
    %503 = vmatpush1.xpose.msra.mxu0 0.0
    %504 = vmatprep.subr.mxu0 0.0
    %505 = vmatpush1.xpose.msra.mxu0 0.0
    %506 = vmatprep.subr.mxu0 0.0
    %507 = vmatpush1.xpose.msra.mxu0 0.0
    %508 = vmatprep.subr.mxu0 0.0
    %509 = vmatpush1.xpose.msra.mxu0 0.0
    %510 = vmatprep.subr.mxu0 %v175
    %511 = vmatpush1.xpose.msra.mxu0 %v174
    %512 = vmatprep.subr.mxu0 %v171
    %513 = vmatpush1.xpose.msra.mxu0 %v170
    %514 = vmatprep.subr.mxu0 %v167
    %515 = vmatpush1.xpose.msra.mxu0 %v166
    %516 = vmatprep.subr.mxu0 %v163
    %517 = vmatpush1.xpose.msra.mxu0 %v162
    %518 = vmatprep.subr.mxu0 0.0
    %519 = vmatpush2.xpose.msra.mxu0 0.0
    %520 = vmatprep.subr.mxu0 0.0
    %521 = vmatpush2.xpose.msra.mxu0 0.0
    %522 = vmatprep.subr.mxu0 0.0
    %523 = vmatpush2.xpose.msra.mxu0 0.0
    %524 = vmatprep.subr.mxu0 0.0
    %525 = vmatpush2.xpose.msra.mxu0 0.0
    %526 = vmatprep.subr.mxu0 0.0
    %527 = vmatpush2.xpose.msra.mxu0 0.0
    %528 = vmatprep.subr.mxu0 0.0
    %529 = vmatpush2.xpose.msra.mxu0 0.0
    %530 = vmatprep.subr.mxu0 0.0
    %531 = vmatpush2.xpose.msra.mxu0 0.0
    %532 = vmatprep.subr.mxu0 0.0
    %533 = vmatpush2.xpose.msra.mxu0 0.0
    %534 = vmatprep.subr.mxu0 0.0
    %535 = vmatpush2.xpose.msra.mxu0 0.0
    %536 = vmatprep.subr.mxu0 0.0
    %537 = vmatpush2.xpose.msra.mxu0 0.0
    %538 = vmatprep.subr.mxu0 0.0
    %539 = vmatpush2.xpose.msra.mxu0 0.0
    %540 = vmatprep.subr.mxu0 0.0
    %541 = vmatpush2.xpose.msra.mxu0 0.0
    %542 = vmatprep.subr.mxu0 0.0
    %543 = vmatpush2.xpose.msra.mxu0 0.0
    %544 = vmatprep.subr.mxu0 0.0
    %545 = vmatpush2.xpose.msra.mxu0 0.0
    %546 = vmatprep.subr.mxu0 0.0
    %547 = vmatpush2.xpose.msra.mxu0 0.0
    %548 = vmatprep.subr.mxu0 0.0
    %549 = vmatpush2.xpose.msra.mxu0 0.0
    %550 = vmatprep.mubr.f32.mxu0 %v402
    %551 = vmatmul.mubr.f32.gmra.mxu0 %v401
    %v552 = vpop.f32.mrf.mxu0
    %v553 = vadd.f32 %v478, %v552
    %v554 = vpop.f32.mrf.mxu0
    %555 = vmatprep.mubr.f32.mxu0 %v406
    %556 = vmatmul.mubr.f32.gmra.mxu0 %v405
    %v557 = vpop.f32.mrf.mxu0
    %v558 = vadd.f32 %v483, %v557
    %v559 = vpop.f32.mrf.mxu0
    %560 = vdwg.mxu0
    %v561 = vadd.f32 %v133, %v553
    %v562 = vadd.f32 %v138, %v558
    %v563 = vld [vmem:[#allocation4 + $0x20] sm:$0x1]
    %v564 = vld [vmem:[#allocation2 + $0x120] sm:$0xff]
    %v565 = vld [vmem:[#allocation2 + $0x128] sm:$0xff]
    %v566 = vld [vmem:[#allocation2 + $0x130] sm:$0xff]
    %v567 = vld [vmem:[#allocation2 + $0x138] sm:$0xff]
    %v568 = vld [vmem:[#allocation2 + $0x140] sm:$0xff]
    %v569 = vld [vmem:[#allocation2 + $0x148] sm:$0xff]
    %v570 = vld [vmem:[#allocation2 + $0x150] sm:$0xff]
    %v571 = vld [vmem:[#allocation2 + $0x158] sm:$0xff]
    %v572 = vld [vmem:[#allocation2 + $0x160] sm:$0xff]
    %v573 = vld [vmem:[#allocation2 + $0x168] sm:$0xff]
    %v574 = vld [vmem:[#allocation2 + $0x170] sm:$0xff]
    %v575 = vld [vmem:[#allocation2 + $0x178] sm:$0xff]
    %v576 = vld [vmem:[#allocation2 + $0x180] sm:$0xff]
    %v577 = vld [vmem:[#allocation2 + $0x188] sm:$0xff]
    %v578 = vld [vmem:[#allocation2 + $0x190] sm:$0xff]
    %v579 = vld [vmem:[#allocation2 + $0x198] sm:$0xff]
    %s580 = scalar_lea.vmem [#allocation2], 544
    %v581 = vld [vmem:[%s580] ss:$8 sm:$0xf]
    %v582 = vld [vmem:[#allocation2 + $0x1a0] sm:$0xff]
    %v583 = vld [vmem:[#allocation2 + $0x1a8] sm:$0xff]
    %v584 = vld [vmem:[#allocation2 + $0x1b0] sm:$0xff]
    %v585 = vld [vmem:[#allocation2 + $0x1b8] sm:$0xff]
    %v586 = vld [vmem:[#allocation2 + $0x1c0] sm:$0xff]
    %v587 = vld [vmem:[#allocation2 + $0x1c8] sm:$0xff]
    %v588 = vld [vmem:[#allocation2 + $0x1d0] sm:$0xff]
    %v589 = vld [vmem:[#allocation2 + $0x1d8] sm:$0xff]
    %v590 = vld [vmem:[#allocation2 + $0x1e0] sm:$0xff]
    %v591 = vld [vmem:[#allocation2 + $0x1e8] sm:$0xff]
    %v592 = vld [vmem:[#allocation2 + $0x1f0] sm:$0xff]
    %v593 = vld [vmem:[#allocation2 + $0x1f8] sm:$0xff]
    %v594 = vld [vmem:[#allocation2 + $0x200] sm:$0xff]
    %v595 = vld [vmem:[#allocation2 + $0x208] sm:$0xff]
    %v596 = vld [vmem:[#allocation2 + $0x210] sm:$0xff]
    %v597 = vld [vmem:[#allocation2 + $0x218] sm:$0xff]
    %v598 = vld [vmem:[#allocation4 + $0x28] sm:$0x1]
    %v599 = vmul.f32 %v561, %v561
    %v600 = vmul.f32 %v562, %v562
    %v601 = vsel %vm179, %v599, 0.0
    %602 = vadd.xlane.f32.xlu0 %v601
    %v603 = vpop.xlane.xlu0 %602
    %v604 = vsel %vm179, %v600, 0.0
    %605 = vadd.xlane.f32.xlu0 %v604
    %v606 = vpop.xlane.xlu0 %605
    %v607 = vsel %vm54, %v599, 0.0
    %v608 = vsel %vm54, %v600, 0.0
    %v609 = vsel %vm179, %v607, 0.0
    %610 = vadd.xlane.f32.xlu0 %v609
    %v611 = vpop.xlane.xlu0 %610
    %v612 = vsel %vm179, %v608, 0.0
    %613 = vadd.xlane.f32.xlu0 %v612
    %v614 = vpop.xlane.xlu0 %613
    %v615 = vmul.f32 %v611, 0.0625
    %v616 = vmul.f32 %v614, 0.0625
    %v617 = vadd.f32 %v615, 1e-08
    %v618 = vadd.f32 %v616, 1e-08
    %v619 = vrsqrt.pop %v617
    %v620 = vrsqrt.pop %v618
    %v621 = vsub.f32 %v603, %v611
    %v622 = vsub.f32 %v606, %v614
    %v623 = vmul.f32 %v621, 0.0625
    %v624 = vmul.f32 %v622, 0.0625
    %v625 = vadd.f32 %v623, 1e-08
    %v626 = vadd.f32 %v624, 1e-08
    %v627 = vrsqrt.pop %v625
    %v628 = vrsqrt.pop %v626
    %v629 = vlaneseq
    %v630 = vshrl.u32 %v629, 7
    %v631 = vsub.s32 0, %v630
    %v632 = vrot.slane %v563, %v631
    %v633 = vmul.f32 %v632, %v561
    %v634 = vmul.f32 %v632, %v562
    %v635 = vsel %vm54, %v619, %v627
    %v636 = vsel %vm54, %v620, %v628
    %v637 = vmul.f32 %v633, %v635
    %v638 = vmul.f32 %v634, %v636
    %v640 = vlaneseq
    %v641 = vshrl.u32 %v640, 7
    %v642 = vsub.s32 0, %v641
    %v643 = vrot.slane %v581, %v642
    %v644 = vlaneseq
    %v645 = vshrl.u32 %v644, 7
    %v646 = vsub.s32 1, %v645
    %v647 = vrot.slane %v581, %v646
    %v648 = vlaneseq
    %v649 = vshrl.u32 %v648, 7
    %v650 = vsub.s32 2, %v649
    %v651 = vrot.slane %v581, %v650
    %v652 = vlaneseq
    %v653 = vshrl.u32 %v652, 7
    %v654 = vsub.s32 3, %v653
    %v655 = vrot.slane %v581, %v654
    %v661 = vsel %vm179, %v637, 0
    %v664 = vsel %vm179, %v638, 0
    %666 = vmatprep.subr.mxu0 0.0
    %667 = vmatpush1.msra.mxu0 0.0
    %668 = vmatprep.subr.mxu0 0.0
    %669 = vmatpush1.msra.mxu0 0.0
    %670 = vmatprep.subr.mxu0 0.0
    %671 = vmatpush1.msra.mxu0 0.0
    %672 = vmatprep.subr.mxu0 0.0
    %673 = vmatpush1.msra.mxu0 0.0
    %674 = vmatprep.subr.mxu0 0.0
    %675 = vmatpush1.msra.mxu0 0.0
    %676 = vmatprep.subr.mxu0 0.0
    %677 = vmatpush1.msra.mxu0 0.0
    %678 = vmatprep.subr.mxu0 0.0
    %679 = vmatpush1.msra.mxu0 0.0
    %680 = vmatprep.subr.mxu0 0.0
    %681 = vmatpush1.msra.mxu0 0.0
    %682 = vmatprep.subr.mxu0 0.0
    %683 = vmatpush1.msra.mxu0 0.0
    %684 = vmatprep.subr.mxu0 0.0
    %685 = vmatpush1.msra.mxu0 0.0
    %686 = vmatprep.subr.mxu0 0.0
    %687 = vmatpush1.msra.mxu0 0.0
    %688 = vmatprep.subr.mxu0 0.0
    %689 = vmatpush1.msra.mxu0 0.0
    %690 = vmatprep.subr.mxu0 %v577
    %691 = vmatpush1.msra.mxu0 %v576
    %692 = vmatprep.subr.mxu0 %v573
    %693 = vmatpush1.msra.mxu0 %v572
    %694 = vmatprep.subr.mxu0 %v569
    %695 = vmatpush1.msra.mxu0 %v568
    %696 = vmatprep.subr.mxu0 %v565
    %697 = vmatpush1.msra.mxu0 %v564
    %698 = vmatprep.subr.mxu0 0.0
    %699 = vmatpush2.msra.mxu0 0.0
    %700 = vmatprep.subr.mxu0 0.0
    %701 = vmatpush2.msra.mxu0 0.0
    %702 = vmatprep.subr.mxu0 0.0
    %703 = vmatpush2.msra.mxu0 0.0
    %704 = vmatprep.subr.mxu0 0.0
    %705 = vmatpush2.msra.mxu0 0.0
    %706 = vmatprep.subr.mxu0 0.0
    %707 = vmatpush2.msra.mxu0 0.0
    %708 = vmatprep.subr.mxu0 0.0
    %709 = vmatpush2.msra.mxu0 0.0
    %710 = vmatprep.subr.mxu0 0.0
    %711 = vmatpush2.msra.mxu0 0.0
    %712 = vmatprep.subr.mxu0 0.0
    %713 = vmatpush2.msra.mxu0 0.0
    %714 = vmatprep.subr.mxu0 0.0
    %715 = vmatpush2.msra.mxu0 0.0
    %716 = vmatprep.subr.mxu0 0.0
    %717 = vmatpush2.msra.mxu0 0.0
    %718 = vmatprep.subr.mxu0 0.0
    %719 = vmatpush2.msra.mxu0 0.0
    %720 = vmatprep.subr.mxu0 0.0
    %721 = vmatpush2.msra.mxu0 0.0
    %722 = vmatprep.subr.mxu0 0.0
    %723 = vmatpush2.msra.mxu0 0.0
    %724 = vmatprep.subr.mxu0 0.0
    %725 = vmatpush2.msra.mxu0 0.0
    %726 = vmatprep.subr.mxu0 0.0
    %727 = vmatpush2.msra.mxu0 0.0
    %728 = vmatprep.subr.mxu0 0.0
    %729 = vmatpush2.msra.mxu0 0.0
    %730 = vmatprep.mubr.f32.mxu0 0.0
    %731 = vmatmul.mubr.f32.gmra.mxu0 %v661
    %v732 = vpop.f32.mrf.mxu0
    %v733 = vadd.f32 %v643, %v732
    %v734 = vpop.f32.mrf.mxu0
    %v735 = vadd.f32 %v647, %v734
    %736 = vmatprep.mubr.f32.mxu0 0.0
    %737 = vmatmul.mubr.f32.gmra.mxu0 %v664
    %v738 = vpop.f32.mrf.mxu0
    %v739 = vadd.f32 %v643, %v738
    %v740 = vpop.f32.mrf.mxu0
    %v741 = vadd.f32 %v647, %v740
    %742 = vdwg.mxu0
    %743 = vmatprep.subr.mxu0 0.0
    %744 = vmatpush1.msra.mxu0 0.0
    %745 = vmatprep.subr.mxu0 0.0
    %746 = vmatpush1.msra.mxu0 0.0
    %747 = vmatprep.subr.mxu0 0.0
    %748 = vmatpush1.msra.mxu0 0.0
    %749 = vmatprep.subr.mxu0 0.0
    %750 = vmatpush1.msra.mxu0 0.0
    %751 = vmatprep.subr.mxu0 0.0
    %752 = vmatpush1.msra.mxu0 0.0
    %753 = vmatprep.subr.mxu0 0.0
    %754 = vmatpush1.msra.mxu0 0.0
    %755 = vmatprep.subr.mxu0 0.0
    %756 = vmatpush1.msra.mxu0 0.0
    %757 = vmatprep.subr.mxu0 0.0
    %758 = vmatpush1.msra.mxu0 0.0
    %759 = vmatprep.subr.mxu0 0.0
    %760 = vmatpush1.msra.mxu0 0.0
    %761 = vmatprep.subr.mxu0 0.0
    %762 = vmatpush1.msra.mxu0 0.0
    %763 = vmatprep.subr.mxu0 0.0
    %764 = vmatpush1.msra.mxu0 0.0
    %765 = vmatprep.subr.mxu0 0.0
    %766 = vmatpush1.msra.mxu0 0.0
    %767 = vmatprep.subr.mxu0 %v579
    %768 = vmatpush1.msra.mxu0 %v578
    %769 = vmatprep.subr.mxu0 %v575
    %770 = vmatpush1.msra.mxu0 %v574
    %771 = vmatprep.subr.mxu0 %v571
    %772 = vmatpush1.msra.mxu0 %v570
    %773 = vmatprep.subr.mxu0 %v567
    %774 = vmatpush1.msra.mxu0 %v566
    %775 = vmatprep.subr.mxu0 0.0
    %776 = vmatpush2.msra.mxu0 0.0
    %777 = vmatprep.subr.mxu0 0.0
    %778 = vmatpush2.msra.mxu0 0.0
    %779 = vmatprep.subr.mxu0 0.0
    %780 = vmatpush2.msra.mxu0 0.0
    %781 = vmatprep.subr.mxu0 0.0
    %782 = vmatpush2.msra.mxu0 0.0
    %783 = vmatprep.subr.mxu0 0.0
    %784 = vmatpush2.msra.mxu0 0.0
    %785 = vmatprep.subr.mxu0 0.0
    %786 = vmatpush2.msra.mxu0 0.0
    %787 = vmatprep.subr.mxu0 0.0
    %788 = vmatpush2.msra.mxu0 0.0
    %789 = vmatprep.subr.mxu0 0.0
    %790 = vmatpush2.msra.mxu0 0.0
    %791 = vmatprep.subr.mxu0 0.0
    %792 = vmatpush2.msra.mxu0 0.0
    %793 = vmatprep.subr.mxu0 0.0
    %794 = vmatpush2.msra.mxu0 0.0
    %795 = vmatprep.subr.mxu0 0.0
    %796 = vmatpush2.msra.mxu0 0.0
    %797 = vmatprep.subr.mxu0 0.0
    %798 = vmatpush2.msra.mxu0 0.0
    %799 = vmatprep.subr.mxu0 0.0
    %800 = vmatpush2.msra.mxu0 0.0
    %801 = vmatprep.subr.mxu0 0.0
    %802 = vmatpush2.msra.mxu0 0.0
    %803 = vmatprep.subr.mxu0 0.0
    %804 = vmatpush2.msra.mxu0 0.0
    %805 = vmatprep.subr.mxu0 0.0
    %806 = vmatpush2.msra.mxu0 0.0
    %807 = vmatprep.mubr.f32.mxu0 0.0
    %808 = vmatmul.mubr.f32.gmra.mxu0 %v661
    %v809 = vpop.f32.mrf.mxu0
    %v810 = vadd.f32 %v651, %v809
    %v811 = vpop.f32.mrf.mxu0
    %v812 = vadd.f32 %v655, %v811
    %813 = vmatprep.mubr.f32.mxu0 0.0
    %814 = vmatmul.mubr.f32.gmra.mxu0 %v664
    %v815 = vpop.f32.mrf.mxu0
    %v816 = vadd.f32 %v651, %v815
    %v817 = vpop.f32.mrf.mxu0
    %v818 = vadd.f32 %v655, %v817
    %819 = vdwg.mxu0
    %v820 = vmax.f32 %v733, 0.0
    %v821 = vmax.f32 %v735, 0.0
    %v822 = vmax.f32 %v810, 0.0
    %v823 = vmax.f32 %v812, 0.0
    %v824 = vmax.f32 %v739, 0.0
    %v825 = vmax.f32 %v741, 0.0
    %v826 = vmax.f32 %v816, 0.0
    %v827 = vmax.f32 %v818, 0.0
    %v828 = vlaneseq
    %v829 = vshrl.u32 %v828, 7
    %v830 = vsub.s32 0, %v829
    %v831 = vrot.slane %v598, %v830
    %832 = vmatprep.subr.mxu0 0.0
    %833 = vmatpush1.xpose.msra.mxu0 0.0
    %834 = vmatprep.subr.mxu0 0.0
    %835 = vmatpush1.xpose.msra.mxu0 0.0
    %836 = vmatprep.subr.mxu0 0.0
    %837 = vmatpush1.xpose.msra.mxu0 0.0
    %838 = vmatprep.subr.mxu0 0.0
    %839 = vmatpush1.xpose.msra.mxu0 0.0
    %840 = vmatprep.subr.mxu0 0.0
    %841 = vmatpush1.xpose.msra.mxu0 0.0
    %842 = vmatprep.subr.mxu0 0.0
    %843 = vmatpush1.xpose.msra.mxu0 0.0
    %844 = vmatprep.subr.mxu0 0.0
    %845 = vmatpush1.xpose.msra.mxu0 0.0
    %846 = vmatprep.subr.mxu0 0.0
    %847 = vmatpush1.xpose.msra.mxu0 0.0
    %848 = vmatprep.subr.mxu0 0.0
    %849 = vmatpush1.xpose.msra.mxu0 0.0
    %850 = vmatprep.subr.mxu0 0.0
    %851 = vmatpush1.xpose.msra.mxu0 0.0
    %852 = vmatprep.subr.mxu0 0.0
    %853 = vmatpush1.xpose.msra.mxu0 0.0
    %854 = vmatprep.subr.mxu0 0.0
    %855 = vmatpush1.xpose.msra.mxu0 0.0
    %856 = vmatprep.subr.mxu0 %v595
    %857 = vmatpush1.xpose.msra.mxu0 %v594
    %858 = vmatprep.subr.mxu0 %v591
    %859 = vmatpush1.xpose.msra.mxu0 %v590
    %860 = vmatprep.subr.mxu0 %v587
    %861 = vmatpush1.xpose.msra.mxu0 %v586
    %862 = vmatprep.subr.mxu0 %v583
    %863 = vmatpush1.xpose.msra.mxu0 %v582
    %864 = vmatprep.subr.mxu0 0.0
    %865 = vmatpush2.xpose.msra.mxu0 0.0
    %866 = vmatprep.subr.mxu0 0.0
    %867 = vmatpush2.xpose.msra.mxu0 0.0
    %868 = vmatprep.subr.mxu0 0.0
    %869 = vmatpush2.xpose.msra.mxu0 0.0
    %870 = vmatprep.subr.mxu0 0.0
    %871 = vmatpush2.xpose.msra.mxu0 0.0
    %872 = vmatprep.subr.mxu0 0.0
    %873 = vmatpush2.xpose.msra.mxu0 0.0
    %874 = vmatprep.subr.mxu0 0.0
    %875 = vmatpush2.xpose.msra.mxu0 0.0
    %876 = vmatprep.subr.mxu0 0.0
    %877 = vmatpush2.xpose.msra.mxu0 0.0
    %878 = vmatprep.subr.mxu0 0.0
    %879 = vmatpush2.xpose.msra.mxu0 0.0
    %880 = vmatprep.subr.mxu0 0.0
    %881 = vmatpush2.xpose.msra.mxu0 0.0
    %882 = vmatprep.subr.mxu0 0.0
    %883 = vmatpush2.xpose.msra.mxu0 0.0
    %884 = vmatprep.subr.mxu0 0.0
    %885 = vmatpush2.xpose.msra.mxu0 0.0
    %886 = vmatprep.subr.mxu0 0.0
    %887 = vmatpush2.xpose.msra.mxu0 0.0
    %888 = vmatprep.subr.mxu0 0.0
    %889 = vmatpush2.xpose.msra.mxu0 0.0
    %890 = vmatprep.subr.mxu0 0.0
    %891 = vmatpush2.xpose.msra.mxu0 0.0
    %892 = vmatprep.subr.mxu0 0.0
    %893 = vmatpush2.xpose.msra.mxu0 0.0
    %894 = vmatprep.subr.mxu0 0.0
    %895 = vmatpush2.xpose.msra.mxu0 0.0
    %896 = vmatprep.mubr.f32.mxu0 %v821
    %897 = vmatmul.mubr.f32.gmra.mxu0 %v820
    %v898 = vpop.f32.mrf.mxu0
    %v899 = vadd.f32 %v831, %v898
    %v900 = vpop.f32.mrf.mxu0
    %901 = vmatprep.mubr.f32.mxu0 %v825
    %902 = vmatmul.mubr.f32.gmra.mxu0 %v824
    %v903 = vpop.f32.mrf.mxu0
    %v904 = vadd.f32 %v831, %v903
    %v905 = vpop.f32.mrf.mxu0
    %906 = vdwg.mxu0
    %907 = vmatprep.subr.mxu0 0.0
    %908 = vmatpush1.xpose.msra.mxu0 0.0
    %909 = vmatprep.subr.mxu0 0.0
    %910 = vmatpush1.xpose.msra.mxu0 0.0
    %911 = vmatprep.subr.mxu0 0.0
    %912 = vmatpush1.xpose.msra.mxu0 0.0
    %913 = vmatprep.subr.mxu0 0.0
    %914 = vmatpush1.xpose.msra.mxu0 0.0
    %915 = vmatprep.subr.mxu0 0.0
    %916 = vmatpush1.xpose.msra.mxu0 0.0
    %917 = vmatprep.subr.mxu0 0.0
    %918 = vmatpush1.xpose.msra.mxu0 0.0
    %919 = vmatprep.subr.mxu0 0.0
    %920 = vmatpush1.xpose.msra.mxu0 0.0
    %921 = vmatprep.subr.mxu0 0.0
    %922 = vmatpush1.xpose.msra.mxu0 0.0
    %923 = vmatprep.subr.mxu0 0.0
    %924 = vmatpush1.xpose.msra.mxu0 0.0
    %925 = vmatprep.subr.mxu0 0.0
    %926 = vmatpush1.xpose.msra.mxu0 0.0
    %927 = vmatprep.subr.mxu0 0.0
    %928 = vmatpush1.xpose.msra.mxu0 0.0
    %929 = vmatprep.subr.mxu0 0.0
    %930 = vmatpush1.xpose.msra.mxu0 0.0
    %931 = vmatprep.subr.mxu0 %v597
    %932 = vmatpush1.xpose.msra.mxu0 %v596
    %933 = vmatprep.subr.mxu0 %v593
    %934 = vmatpush1.xpose.msra.mxu0 %v592
    %935 = vmatprep.subr.mxu0 %v589
    %936 = vmatpush1.xpose.msra.mxu0 %v588
    %937 = vmatprep.subr.mxu0 %v585
    %938 = vmatpush1.xpose.msra.mxu0 %v584
    %939 = vmatprep.subr.mxu0 0.0
    %940 = vmatpush2.xpose.msra.mxu0 0.0
    %941 = vmatprep.subr.mxu0 0.0
    %942 = vmatpush2.xpose.msra.mxu0 0.0
    %943 = vmatprep.subr.mxu0 0.0
    %944 = vmatpush2.xpose.msra.mxu0 0.0
    %945 = vmatprep.subr.mxu0 0.0
    %946 = vmatpush2.xpose.msra.mxu0 0.0
    %947 = vmatprep.subr.mxu0 0.0
    %948 = vmatpush2.xpose.msra.mxu0 0.0
    %949 = vmatprep.subr.mxu0 0.0
    %950 = vmatpush2.xpose.msra.mxu0 0.0
    %951 = vmatprep.subr.mxu0 0.0
    %952 = vmatpush2.xpose.msra.mxu0 0.0
    %953 = vmatprep.subr.mxu0 0.0
    %954 = vmatpush2.xpose.msra.mxu0 0.0
    %955 = vmatprep.subr.mxu0 0.0
    %956 = vmatpush2.xpose.msra.mxu0 0.0
    %957 = vmatprep.subr.mxu0 0.0
    %958 = vmatpush2.xpose.msra.mxu0 0.0
    %959 = vmatprep.subr.mxu0 0.0
    %960 = vmatpush2.xpose.msra.mxu0 0.0
    %961 = vmatprep.subr.mxu0 0.0
    %962 = vmatpush2.xpose.msra.mxu0 0.0
    %963 = vmatprep.subr.mxu0 0.0
    %964 = vmatpush2.xpose.msra.mxu0 0.0
    %965 = vmatprep.subr.mxu0 0.0
    %966 = vmatpush2.xpose.msra.mxu0 0.0
    %967 = vmatprep.subr.mxu0 0.0
    %968 = vmatpush2.xpose.msra.mxu0 0.0
    %969 = vmatprep.subr.mxu0 0.0
    %970 = vmatpush2.xpose.msra.mxu0 0.0
    %971 = vmatprep.mubr.f32.mxu0 %v823
    %972 = vmatmul.mubr.f32.gmra.mxu0 %v822
    %v973 = vpop.f32.mrf.mxu0
    %v974 = vadd.f32 %v899, %v973
    %v975 = vpop.f32.mrf.mxu0
    %976 = vmatprep.mubr.f32.mxu0 %v827
    %977 = vmatmul.mubr.f32.gmra.mxu0 %v826
    %v978 = vpop.f32.mrf.mxu0
    %v979 = vadd.f32 %v904, %v978
    %v980 = vpop.f32.mrf.mxu0
    %981 = vdwg.mxu0
    %v982 = vadd.f32 %v561, %v974
    %v983 = vadd.f32 %v562, %v979
    %986 = vrot.lane.b32.xlu0 %v982, 112
    %v987 = vpop.permute.xlu0 %986
    %988 = vrot.lane.b32.xlu0 %v983, 112
    %v989 = vpop.permute.xlu0 %988
    %v992 = vadd.f32 %v982, %v987
    %v993 = vadd.f32 %v983, %v989
    %v994 = vld [vmem:[#allocation4 + $0x30] sm:$0xff]
    %v995 = vld [vmem:[#allocation4 + $0x38] sm:$0xff]
    %v996 = vld [vmem:[#allocation4 + $0x40] sm:$0xff]
    %v997 = vld [vmem:[#allocation4 + $0x48] sm:$0xff]
    %v998 = vld [vmem:[#allocation4 + $0x50] sm:$0xff]
    %v999 = vld [vmem:[#allocation4 + $0x58] sm:$0xff]
    %v1000 = vld [vmem:[#allocation4 + $0x60] sm:$0x1]
    %v1001 = vld [vmem:[#allocation4 + $0x68] sm:$0xff]
    %v1002 = vld [vmem:[#allocation4 + $0x70] sm:$0xff]
    %v1003 = vld [vmem:[#allocation4 + $0x78] sm:$0xff]
    %v1004 = vld [vmem:[#allocation4 + $0x80] sm:$0xff]
    %v1005 = vld [vmem:[#allocation4 + $0x88] sm:$0x1]
    %v1006 = vmul.f32 %v55, %v55
    %v1007 = vmul.f32 %v56, %v56
    %v1009 = vsel %vm59, %v994, 0
    %v1012 = vsel %vm59, %v995, 0
    %1014 = vmatprep.subr.mxu0 0.0
    %1015 = vmatpush1.msra.mxu0 0.0
    %1016 = vmatprep.subr.mxu0 0.0
    %1017 = vmatpush1.msra.mxu0 0.0
    %1018 = vmatprep.subr.mxu0 0.0
    %1019 = vmatpush1.msra.mxu0 0.0
    %1020 = vmatprep.subr.mxu0 0.0
    %1021 = vmatpush1.msra.mxu0 0.0
    %1022 = vmatprep.subr.mxu0 0.0
    %1023 = vmatpush1.msra.mxu0 0.0
    %1024 = vmatprep.subr.mxu0 0.0
    %1025 = vmatpush1.msra.mxu0 0.0
    %1026 = vmatprep.subr.mxu0 0.0
    %1027 = vmatpush1.msra.mxu0 0.0
    %1028 = vmatprep.subr.mxu0 0.0
    %1029 = vmatpush1.msra.mxu0 0.0
    %1030 = vmatprep.subr.mxu0 0.0
    %1031 = vmatpush1.msra.mxu0 0.0
    %1032 = vmatprep.subr.mxu0 0.0
    %1033 = vmatpush1.msra.mxu0 0.0
    %1034 = vmatprep.subr.mxu0 0.0
    %1035 = vmatpush1.msra.mxu0 0.0
    %1036 = vmatprep.subr.mxu0 0.0
    %1037 = vmatpush1.msra.mxu0 0.0
    %1038 = vmatprep.subr.mxu0 0.0
    %1039 = vmatpush1.msra.mxu0 0.0
    %1040 = vmatprep.subr.mxu0 0.0
    %1041 = vmatpush1.msra.mxu0 0.0
    %1042 = vmatprep.subr.mxu0 0.0
    %1043 = vmatpush1.msra.mxu0 %v1007
    %1044 = vmatprep.subr.mxu0 0.0
    %1045 = vmatpush1.msra.mxu0 %v1006
    %1046 = vmatprep.subr.mxu0 0.0
    %1047 = vmatpush2.msra.mxu0 0.0
    %1048 = vmatprep.subr.mxu0 0.0
    %1049 = vmatpush2.msra.mxu0 0.0
    %1050 = vmatprep.subr.mxu0 0.0
    %1051 = vmatpush2.msra.mxu0 0.0
    %1052 = vmatprep.subr.mxu0 0.0
    %1053 = vmatpush2.msra.mxu0 0.0
    %1054 = vmatprep.subr.mxu0 0.0
    %1055 = vmatpush2.msra.mxu0 0.0
    %1056 = vmatprep.subr.mxu0 0.0
    %1057 = vmatpush2.msra.mxu0 0.0
    %1058 = vmatprep.subr.mxu0 0.0
    %1059 = vmatpush2.msra.mxu0 0.0
    %1060 = vmatprep.subr.mxu0 0.0
    %1061 = vmatpush2.msra.mxu0 0.0
    %1062 = vmatprep.subr.mxu0 0.0
    %1063 = vmatpush2.msra.mxu0 0.0
    %1064 = vmatprep.subr.mxu0 0.0
    %1065 = vmatpush2.msra.mxu0 0.0
    %1066 = vmatprep.subr.mxu0 0.0
    %1067 = vmatpush2.msra.mxu0 0.0
    %1068 = vmatprep.subr.mxu0 0.0
    %1069 = vmatpush2.msra.mxu0 0.0
    %1070 = vmatprep.subr.mxu0 0.0
    %1071 = vmatpush2.msra.mxu0 0.0
    %1072 = vmatprep.subr.mxu0 0.0
    %1073 = vmatpush2.msra.mxu0 0.0
    %1074 = vmatprep.subr.mxu0 0.0
    %1075 = vmatpush2.msra.mxu0 0.0
    %1076 = vmatprep.subr.mxu0 0.0
    %1077 = vmatpush2.msra.mxu0 0.0
    %1078 = vmatprep.mubr.f32.mxu0 0.0
    %1079 = vmatmul.mubr.f32.gmra.mxu0 %v1009
    %v1080 = vpop.f32.mrf.mxu0
    %v1081 = vadd.f32 0.0, %v1080
    %v1082 = vpop.f32.mrf.mxu0
    %1083 = vmatprep.mubr.f32.mxu0 0.0
    %1084 = vmatmul.mubr.f32.gmra.mxu0 %v1012
    %v1085 = vpop.f32.mrf.mxu0
    %v1086 = vadd.f32 0.0, %v1085
    %v1087 = vpop.f32.mrf.mxu0
    %1088 = vdwg.mxu0
    %v1089 = vsel %vm59, %v1081, 0.0
    %1090 = vadd.xlane.f32.xlu0 %v1089
    %v1091 = vpop.xlane.xlu0 %1090
    %v1092 = vsel %vm59, %v1086, 0.0
    %1093 = vadd.xlane.f32.xlu0 %v1092
    %v1094 = vpop.xlane.xlu0 %1093
    %v1095 = vrcp.pop 16.0
    %v1096 = vmul.f32 %v1091, %v1095
    %v1097 = vmul.f32 %v1094, %v1095
    %v1098 = vmul.f32 %v996, %v55
    %v1099 = vmul.f32 %v997, %v56
    %v1100 = vadd.f32 %v1096, 1e-08
    %v1101 = vadd.f32 %v1097, 1e-08
    %v1102 = vrsqrt.pop %v1100
    %v1103 = vrsqrt.pop %v1101
    %v1104 = vmul.f32 %v1098, %v1102
    %v1105 = vmul.f32 %v1099, %v1103
    %v1106 = vlaneseq
    %v1107 = vshrl.u32 %v1106, 7
    %v1108 = vsub.s32 0, %v1107
    %v1109 = vrot.slane %v1000, %v1108
    %v1111 = vsel %vm59, %v1104, 0
    %v1114 = vsel %vm59, %v1105, 0
    %1116 = vmatprep.subr.mxu0 0.0
    %1117 = vmatpush1.msra.mxu0 0.0
    %1118 = vmatprep.subr.mxu0 0.0
    %1119 = vmatpush1.msra.mxu0 0.0
    %1120 = vmatprep.subr.mxu0 0.0
    %1121 = vmatpush1.msra.mxu0 0.0
    %1122 = vmatprep.subr.mxu0 0.0
    %1123 = vmatpush1.msra.mxu0 0.0
    %1124 = vmatprep.subr.mxu0 0.0
    %1125 = vmatpush1.msra.mxu0 0.0
    %1126 = vmatprep.subr.mxu0 0.0
    %1127 = vmatpush1.msra.mxu0 0.0
    %1128 = vmatprep.subr.mxu0 0.0
    %1129 = vmatpush1.msra.mxu0 0.0
    %1130 = vmatprep.subr.mxu0 0.0
    %1131 = vmatpush1.msra.mxu0 0.0
    %1132 = vmatprep.subr.mxu0 0.0
    %1133 = vmatpush1.msra.mxu0 0.0
    %1134 = vmatprep.subr.mxu0 0.0
    %1135 = vmatpush1.msra.mxu0 0.0
    %1136 = vmatprep.subr.mxu0 0.0
    %1137 = vmatpush1.msra.mxu0 0.0
    %1138 = vmatprep.subr.mxu0 0.0
    %1139 = vmatpush1.msra.mxu0 0.0
    %1140 = vmatprep.subr.mxu0 0.0
    %1141 = vmatpush1.msra.mxu0 0.0
    %1142 = vmatprep.subr.mxu0 0.0
    %1143 = vmatpush1.msra.mxu0 0.0
    %1144 = vmatprep.subr.mxu0 0.0
    %1145 = vmatpush1.msra.mxu0 %v999
    %1146 = vmatprep.subr.mxu0 0.0
    %1147 = vmatpush1.msra.mxu0 %v998
    %1148 = vmatprep.subr.mxu0 0.0
    %1149 = vmatpush2.msra.mxu0 0.0
    %1150 = vmatprep.subr.mxu0 0.0
    %1151 = vmatpush2.msra.mxu0 0.0
    %1152 = vmatprep.subr.mxu0 0.0
    %1153 = vmatpush2.msra.mxu0 0.0
    %1154 = vmatprep.subr.mxu0 0.0
    %1155 = vmatpush2.msra.mxu0 0.0
    %1156 = vmatprep.subr.mxu0 0.0
    %1157 = vmatpush2.msra.mxu0 0.0
    %1158 = vmatprep.subr.mxu0 0.0
    %1159 = vmatpush2.msra.mxu0 0.0
    %1160 = vmatprep.subr.mxu0 0.0
    %1161 = vmatpush2.msra.mxu0 0.0
    %1162 = vmatprep.subr.mxu0 0.0
    %1163 = vmatpush2.msra.mxu0 0.0
    %1164 = vmatprep.subr.mxu0 0.0
    %1165 = vmatpush2.msra.mxu0 0.0
    %1166 = vmatprep.subr.mxu0 0.0
    %1167 = vmatpush2.msra.mxu0 0.0
    %1168 = vmatprep.subr.mxu0 0.0
    %1169 = vmatpush2.msra.mxu0 0.0
    %1170 = vmatprep.subr.mxu0 0.0
    %1171 = vmatpush2.msra.mxu0 0.0
    %1172 = vmatprep.subr.mxu0 0.0
    %1173 = vmatpush2.msra.mxu0 0.0
    %1174 = vmatprep.subr.mxu0 0.0
    %1175 = vmatpush2.msra.mxu0 0.0
    %1176 = vmatprep.subr.mxu0 0.0
    %1177 = vmatpush2.msra.mxu0 0.0
    %1178 = vmatprep.subr.mxu0 0.0
    %1179 = vmatpush2.msra.mxu0 0.0
    %1180 = vmatprep.mubr.f32.mxu0 0.0
    %1181 = vmatmul.mubr.f32.gmra.mxu0 %v1111
    %v1182 = vpop.f32.mrf.mxu0
    %v1183 = vadd.f32 %v1109, %v1182
    %v1184 = vpop.f32.mrf.mxu0
    %1185 = vmatprep.mubr.f32.mxu0 0.0
    %1186 = vmatmul.mubr.f32.gmra.mxu0 %v1114
    %v1187 = vpop.f32.mrf.mxu0
    %v1188 = vadd.f32 %v1109, %v1187
    %v1189 = vpop.f32.mrf.mxu0
    %1190 = vdwg.mxu0
    %v1191 = vmax.f32 %v1183, 0.0
    %v1192 = vmax.f32 %v1188, 0.0
    %v1193 = vlaneseq
    %v1194 = vshrl.u32 %v1193, 7
    %v1195 = vsub.s32 0, %v1194
    %v1196 = vrot.slane %v1005, %v1195
    %v1198 = vsel %vm179, %v1191, 0
    %v1201 = vsel %vm179, %v1192, 0
    %1203 = vmatprep.subr.mxu0 0.0
    %1204 = vmatpush1.msra.mxu0 0.0
    %1205 = vmatprep.subr.mxu0 0.0
    %1206 = vmatpush1.msra.mxu0 0.0
    %1207 = vmatprep.subr.mxu0 0.0
    %1208 = vmatpush1.msra.mxu0 0.0
    %1209 = vmatprep.subr.mxu0 0.0
    %1210 = vmatpush1.msra.mxu0 0.0
    %1211 = vmatprep.subr.mxu0 0.0
    %1212 = vmatpush1.msra.mxu0 0.0
    %1213 = vmatprep.subr.mxu0 0.0
    %1214 = vmatpush1.msra.mxu0 0.0
    %1215 = vmatprep.subr.mxu0 0.0
    %1216 = vmatpush1.msra.mxu0 0.0
    %1217 = vmatprep.subr.mxu0 0.0
    %1218 = vmatpush1.msra.mxu0 0.0
    %1219 = vmatprep.subr.mxu0 0.0
    %1220 = vmatpush1.msra.mxu0 0.0
    %1221 = vmatprep.subr.mxu0 0.0
    %1222 = vmatpush1.msra.mxu0 0.0
    %1223 = vmatprep.subr.mxu0 0.0
    %1224 = vmatpush1.msra.mxu0 0.0
    %1225 = vmatprep.subr.mxu0 0.0
    %1226 = vmatpush1.msra.mxu0 0.0
    %1227 = vmatprep.subr.mxu0 0.0
    %1228 = vmatpush1.msra.mxu0 %v1004
    %1229 = vmatprep.subr.mxu0 0.0
    %1230 = vmatpush1.msra.mxu0 %v1003
    %1231 = vmatprep.subr.mxu0 0.0
    %1232 = vmatpush1.msra.mxu0 %v1002
    %1233 = vmatprep.subr.mxu0 0.0
    %1234 = vmatpush1.msra.mxu0 %v1001
    %1235 = vmatprep.subr.mxu0 0.0
    %1236 = vmatpush2.msra.mxu0 0.0
    %1237 = vmatprep.subr.mxu0 0.0
    %1238 = vmatpush2.msra.mxu0 0.0
    %1239 = vmatprep.subr.mxu0 0.0
    %1240 = vmatpush2.msra.mxu0 0.0
    %1241 = vmatprep.subr.mxu0 0.0
    %1242 = vmatpush2.msra.mxu0 0.0
    %1243 = vmatprep.subr.mxu0 0.0
    %1244 = vmatpush2.msra.mxu0 0.0
    %1245 = vmatprep.subr.mxu0 0.0
    %1246 = vmatpush2.msra.mxu0 0.0
    %1247 = vmatprep.subr.mxu0 0.0
    %1248 = vmatpush2.msra.mxu0 0.0
    %1249 = vmatprep.subr.mxu0 0.0
    %1250 = vmatpush2.msra.mxu0 0.0
    %1251 = vmatprep.subr.mxu0 0.0
    %1252 = vmatpush2.msra.mxu0 0.0
    %1253 = vmatprep.subr.mxu0 0.0
    %1254 = vmatpush2.msra.mxu0 0.0
    %1255 = vmatprep.subr.mxu0 0.0
    %1256 = vmatpush2.msra.mxu0 0.0
    %1257 = vmatprep.subr.mxu0 0.0
    %1258 = vmatpush2.msra.mxu0 0.0
    %1259 = vmatprep.subr.mxu0 0.0
    %1260 = vmatpush2.msra.mxu0 0.0
    %1261 = vmatprep.subr.mxu0 0.0
    %1262 = vmatpush2.msra.mxu0 0.0
    %1263 = vmatprep.subr.mxu0 0.0
    %1264 = vmatpush2.msra.mxu0 0.0
    %1265 = vmatprep.subr.mxu0 0.0
    %1266 = vmatpush2.msra.mxu0 0.0
    %1267 = vmatprep.mubr.f32.mxu0 0.0
    %1268 = vmatmul.mubr.f32.gmra.mxu0 %v1198
    %v1269 = vpop.f32.mrf.mxu0
    %v1270 = vadd.f32 %v1196, %v1269
    %v1271 = vpop.f32.mrf.mxu0
    %1272 = vmatprep.mubr.f32.mxu0 0.0
    %1273 = vmatmul.mubr.f32.gmra.mxu0 %v1201
    %v1274 = vpop.f32.mrf.mxu0
    %v1275 = vadd.f32 %v1196, %v1274
    %v1276 = vpop.f32.mrf.mxu0
    %1277 = vdwg.mxu0
    %v1278 = vadd.f32 %v1270, %v992
    %v1279 = vadd.f32 %v1275, %v993
    %v1280 = vld [vmem:[#allocation4 + $0x90] sm:$0xff]
    %v1281 = vld [vmem:[#allocation4 + $0x98] sm:$0xff]
    %v1282 = vld [vmem:[#allocation4 + $0xa0] sm:$0xff]
    %v1283 = vld [vmem:[#allocation4 + $0xa8] sm:$0xff]
    %v1284 = vld [vmem:[#allocation4 + $0xb0] sm:$0x1]
    %v1285 = vld [vmem:[#allocation4 + $0xb8] sm:$0xff]
    %v1286 = vld [vmem:[#allocation4 + $0xc0] sm:$0xff]
    %v1287 = vld [vmem:[#allocation4 + $0xc8] sm:$0xff]
    %v1288 = vld [vmem:[#allocation4 + $0xd0] sm:$0xff]
    %v1289 = vld [vmem:[#allocation4 + $0xd8] sm:$0x1]
    %v1290 = vmul.f32 %v1278, %v1278
    %v1291 = vmul.f32 %v1279, %v1279
    %1292 = vmatprep.subr.mxu0 0.0
    %1293 = vmatpush1.msra.mxu0 0.0
    %1294 = vmatprep.subr.mxu0 0.0
    %1295 = vmatpush1.msra.mxu0 0.0
    %1296 = vmatprep.subr.mxu0 0.0
    %1297 = vmatpush1.msra.mxu0 0.0
    %1298 = vmatprep.subr.mxu0 0.0
    %1299 = vmatpush1.msra.mxu0 0.0
    %1300 = vmatprep.subr.mxu0 0.0
    %1301 = vmatpush1.msra.mxu0 0.0
    %1302 = vmatprep.subr.mxu0 0.0
    %1303 = vmatpush1.msra.mxu0 0.0
    %1304 = vmatprep.subr.mxu0 0.0
    %1305 = vmatpush1.msra.mxu0 0.0
    %1306 = vmatprep.subr.mxu0 0.0
    %1307 = vmatpush1.msra.mxu0 0.0
    %1308 = vmatprep.subr.mxu0 0.0
    %1309 = vmatpush1.msra.mxu0 0.0
    %1310 = vmatprep.subr.mxu0 0.0
    %1311 = vmatpush1.msra.mxu0 0.0
    %1312 = vmatprep.subr.mxu0 0.0
    %1313 = vmatpush1.msra.mxu0 0.0
    %1314 = vmatprep.subr.mxu0 0.0
    %1315 = vmatpush1.msra.mxu0 0.0
    %1316 = vmatprep.subr.mxu0 0.0
    %1317 = vmatpush1.msra.mxu0 0.0
    %1318 = vmatprep.subr.mxu0 0.0
    %1319 = vmatpush1.msra.mxu0 0.0
    %1320 = vmatprep.subr.mxu0 0.0
    %1321 = vmatpush1.msra.mxu0 %v1291
    %1322 = vmatprep.subr.mxu0 0.0
    %1323 = vmatpush1.msra.mxu0 %v1290
    %1324 = vmatprep.subr.mxu0 0.0
    %1325 = vmatpush2.msra.mxu0 0.0
    %1326 = vmatprep.subr.mxu0 0.0
    %1327 = vmatpush2.msra.mxu0 0.0
    %1328 = vmatprep.subr.mxu0 0.0
    %1329 = vmatpush2.msra.mxu0 0.0
    %1330 = vmatprep.subr.mxu0 0.0
    %1331 = vmatpush2.msra.mxu0 0.0
    %1332 = vmatprep.subr.mxu0 0.0
    %1333 = vmatpush2.msra.mxu0 0.0
    %1334 = vmatprep.subr.mxu0 0.0
    %1335 = vmatpush2.msra.mxu0 0.0
    %1336 = vmatprep.subr.mxu0 0.0
    %1337 = vmatpush2.msra.mxu0 0.0
    %1338 = vmatprep.subr.mxu0 0.0
    %1339 = vmatpush2.msra.mxu0 0.0
    %1340 = vmatprep.subr.mxu0 0.0
    %1341 = vmatpush2.msra.mxu0 0.0
    %1342 = vmatprep.subr.mxu0 0.0
    %1343 = vmatpush2.msra.mxu0 0.0
    %1344 = vmatprep.subr.mxu0 0.0
    %1345 = vmatpush2.msra.mxu0 0.0
    %1346 = vmatprep.subr.mxu0 0.0
    %1347 = vmatpush2.msra.mxu0 0.0
    %1348 = vmatprep.subr.mxu0 0.0
    %1349 = vmatpush2.msra.mxu0 0.0
    %1350 = vmatprep.subr.mxu0 0.0
    %1351 = vmatpush2.msra.mxu0 0.0
    %1352 = vmatprep.subr.mxu0 0.0
    %1353 = vmatpush2.msra.mxu0 0.0
    %1354 = vmatprep.subr.mxu0 0.0
    %1355 = vmatpush2.msra.mxu0 0.0
    %1356 = vmatprep.mubr.f32.mxu0 0.0
    %1357 = vmatmul.mubr.f32.gmra.mxu0 %v1009
    %v1358 = vpop.f32.mrf.mxu0
    %v1359 = vadd.f32 0.0, %v1358
    %v1360 = vpop.f32.mrf.mxu0
    %1361 = vmatprep.mubr.f32.mxu0 0.0
    %1362 = vmatmul.mubr.f32.gmra.mxu0 %v1012
    %v1363 = vpop.f32.mrf.mxu0
    %v1364 = vadd.f32 0.0, %v1363
    %v1365 = vpop.f32.mrf.mxu0
    %1366 = vdwg.mxu0
    %v1367 = vsel %vm59, %v1359, 0.0
    %1368 = vadd.xlane.f32.xlu0 %v1367
    %v1369 = vpop.xlane.xlu0 %1368
    %v1370 = vsel %vm59, %v1364, 0.0
    %1371 = vadd.xlane.f32.xlu0 %v1370
    %v1372 = vpop.xlane.xlu0 %1371
    %v1373 = vmul.f32 %v1369, %v1095
    %v1374 = vmul.f32 %v1372, %v1095
    %v1375 = vmul.f32 %v1280, %v1278
    %v1376 = vmul.f32 %v1281, %v1279
    %v1377 = vadd.f32 %v1373, 1e-08
    %v1378 = vadd.f32 %v1374, 1e-08
    %v1379 = vrsqrt.pop %v1377
    %v1380 = vrsqrt.pop %v1378
    %v1381 = vmul.f32 %v1375, %v1379
    %v1382 = vmul.f32 %v1376, %v1380
    %v1383 = vlaneseq
    %v1384 = vshrl.u32 %v1383, 7
    %v1385 = vsub.s32 0, %v1384
    %v1386 = vrot.slane %v1284, %v1385
    %v1388 = vsel %vm59, %v1381, 0
    %v1391 = vsel %vm59, %v1382, 0
    %1393 = vmatprep.subr.mxu0 0.0
    %1394 = vmatpush1.msra.mxu0 0.0
    %1395 = vmatprep.subr.mxu0 0.0
    %1396 = vmatpush1.msra.mxu0 0.0
    %1397 = vmatprep.subr.mxu0 0.0
    %1398 = vmatpush1.msra.mxu0 0.0
    %1399 = vmatprep.subr.mxu0 0.0
    %1400 = vmatpush1.msra.mxu0 0.0
    %1401 = vmatprep.subr.mxu0 0.0
    %1402 = vmatpush1.msra.mxu0 0.0
    %1403 = vmatprep.subr.mxu0 0.0
    %1404 = vmatpush1.msra.mxu0 0.0
    %1405 = vmatprep.subr.mxu0 0.0
    %1406 = vmatpush1.msra.mxu0 0.0
    %1407 = vmatprep.subr.mxu0 0.0
    %1408 = vmatpush1.msra.mxu0 0.0
    %1409 = vmatprep.subr.mxu0 0.0
    %1410 = vmatpush1.msra.mxu0 0.0
    %1411 = vmatprep.subr.mxu0 0.0
    %1412 = vmatpush1.msra.mxu0 0.0
    %1413 = vmatprep.subr.mxu0 0.0
    %1414 = vmatpush1.msra.mxu0 0.0
    %1415 = vmatprep.subr.mxu0 0.0
    %1416 = vmatpush1.msra.mxu0 0.0
    %1417 = vmatprep.subr.mxu0 0.0
    %1418 = vmatpush1.msra.mxu0 0.0
    %1419 = vmatprep.subr.mxu0 0.0
    %1420 = vmatpush1.msra.mxu0 0.0
    %1421 = vmatprep.subr.mxu0 0.0
    %1422 = vmatpush1.msra.mxu0 %v1283
    %1423 = vmatprep.subr.mxu0 0.0
    %1424 = vmatpush1.msra.mxu0 %v1282
    %1425 = vmatprep.subr.mxu0 0.0
    %1426 = vmatpush2.msra.mxu0 0.0
    %1427 = vmatprep.subr.mxu0 0.0
    %1428 = vmatpush2.msra.mxu0 0.0
    %1429 = vmatprep.subr.mxu0 0.0
    %1430 = vmatpush2.msra.mxu0 0.0
    %1431 = vmatprep.subr.mxu0 0.0
    %1432 = vmatpush2.msra.mxu0 0.0
    %1433 = vmatprep.subr.mxu0 0.0
    %1434 = vmatpush2.msra.mxu0 0.0
    %1435 = vmatprep.subr.mxu0 0.0
    %1436 = vmatpush2.msra.mxu0 0.0
    %1437 = vmatprep.subr.mxu0 0.0
    %1438 = vmatpush2.msra.mxu0 0.0
    %1439 = vmatprep.subr.mxu0 0.0
    %1440 = vmatpush2.msra.mxu0 0.0
    %1441 = vmatprep.subr.mxu0 0.0
    %1442 = vmatpush2.msra.mxu0 0.0
    %1443 = vmatprep.subr.mxu0 0.0
    %1444 = vmatpush2.msra.mxu0 0.0
    %1445 = vmatprep.subr.mxu0 0.0
    %1446 = vmatpush2.msra.mxu0 0.0
    %1447 = vmatprep.subr.mxu0 0.0
    %1448 = vmatpush2.msra.mxu0 0.0
    %1449 = vmatprep.subr.mxu0 0.0
    %1450 = vmatpush2.msra.mxu0 0.0
    %1451 = vmatprep.subr.mxu0 0.0
    %1452 = vmatpush2.msra.mxu0 0.0
    %1453 = vmatprep.subr.mxu0 0.0
    %1454 = vmatpush2.msra.mxu0 0.0
    %1455 = vmatprep.subr.mxu0 0.0
    %1456 = vmatpush2.msra.mxu0 0.0
    %1457 = vmatprep.mubr.f32.mxu0 0.0
    %1458 = vmatmul.mubr.f32.gmra.mxu0 %v1388
    %v1459 = vpop.f32.mrf.mxu0
    %v1460 = vadd.f32 %v1386, %v1459
    %v1461 = vpop.f32.mrf.mxu0
    %1462 = vmatprep.mubr.f32.mxu0 0.0
    %1463 = vmatmul.mubr.f32.gmra.mxu0 %v1391
    %v1464 = vpop.f32.mrf.mxu0
    %v1465 = vadd.f32 %v1386, %v1464
    %v1466 = vpop.f32.mrf.mxu0
    %1467 = vdwg.mxu0
    %v1468 = vmax.f32 %v1460, 0.0
    %v1469 = vmax.f32 %v1465, 0.0
    %v1470 = vlaneseq
    %v1471 = vshrl.u32 %v1470, 7
    %v1472 = vsub.s32 0, %v1471
    %v1473 = vrot.slane %v1289, %v1472
    %v1475 = vsel %vm179, %v1468, 0
    %v1478 = vsel %vm179, %v1469, 0
    %1480 = vmatprep.subr.mxu0 0.0
    %1481 = vmatpush1.msra.mxu0 0.0
    %1482 = vmatprep.subr.mxu0 0.0
    %1483 = vmatpush1.msra.mxu0 0.0
    %1484 = vmatprep.subr.mxu0 0.0
    %1485 = vmatpush1.msra.mxu0 0.0
    %1486 = vmatprep.subr.mxu0 0.0
    %1487 = vmatpush1.msra.mxu0 0.0
    %1488 = vmatprep.subr.mxu0 0.0
    %1489 = vmatpush1.msra.mxu0 0.0
    %1490 = vmatprep.subr.mxu0 0.0
    %1491 = vmatpush1.msra.mxu0 0.0
    %1492 = vmatprep.subr.mxu0 0.0
    %1493 = vmatpush1.msra.mxu0 0.0
    %1494 = vmatprep.subr.mxu0 0.0
    %1495 = vmatpush1.msra.mxu0 0.0
    %1496 = vmatprep.subr.mxu0 0.0
    %1497 = vmatpush1.msra.mxu0 0.0
    %1498 = vmatprep.subr.mxu0 0.0
    %1499 = vmatpush1.msra.mxu0 0.0
    %1500 = vmatprep.subr.mxu0 0.0
    %1501 = vmatpush1.msra.mxu0 0.0
    %1502 = vmatprep.subr.mxu0 0.0
    %1503 = vmatpush1.msra.mxu0 0.0
    %1504 = vmatprep.subr.mxu0 0.0
    %1505 = vmatpush1.msra.mxu0 %v1288
    %1506 = vmatprep.subr.mxu0 0.0
    %1507 = vmatpush1.msra.mxu0 %v1287
    %1508 = vmatprep.subr.mxu0 0.0
    %1509 = vmatpush1.msra.mxu0 %v1286
    %1510 = vmatprep.subr.mxu0 0.0
    %1511 = vmatpush1.msra.mxu0 %v1285
    %1512 = vmatprep.subr.mxu0 0.0
    %1513 = vmatpush2.msra.mxu0 0.0
    %1514 = vmatprep.subr.mxu0 0.0
    %1515 = vmatpush2.msra.mxu0 0.0
    %1516 = vmatprep.subr.mxu0 0.0
    %1517 = vmatpush2.msra.mxu0 0.0
    %1518 = vmatprep.subr.mxu0 0.0
    %1519 = vmatpush2.msra.mxu0 0.0
    %1520 = vmatprep.subr.mxu0 0.0
    %1521 = vmatpush2.msra.mxu0 0.0
    %1522 = vmatprep.subr.mxu0 0.0
    %1523 = vmatpush2.msra.mxu0 0.0
    %1524 = vmatprep.subr.mxu0 0.0
    %1525 = vmatpush2.msra.mxu0 0.0
    %1526 = vmatprep.subr.mxu0 0.0
    %1527 = vmatpush2.msra.mxu0 0.0
    %1528 = vmatprep.subr.mxu0 0.0
    %1529 = vmatpush2.msra.mxu0 0.0
    %1530 = vmatprep.subr.mxu0 0.0
    %1531 = vmatpush2.msra.mxu0 0.0
    %1532 = vmatprep.subr.mxu0 0.0
    %1533 = vmatpush2.msra.mxu0 0.0
    %1534 = vmatprep.subr.mxu0 0.0
    %1535 = vmatpush2.msra.mxu0 0.0
    %1536 = vmatprep.subr.mxu0 0.0
    %1537 = vmatpush2.msra.mxu0 0.0
    %1538 = vmatprep.subr.mxu0 0.0
    %1539 = vmatpush2.msra.mxu0 0.0
    %1540 = vmatprep.subr.mxu0 0.0
    %1541 = vmatpush2.msra.mxu0 0.0
    %1542 = vmatprep.subr.mxu0 0.0
    %1543 = vmatpush2.msra.mxu0 0.0
    %1544 = vmatprep.mubr.f32.mxu0 0.0
    %1545 = vmatmul.mubr.f32.gmra.mxu0 %v1475
    %v1546 = vpop.f32.mrf.mxu0
    %v1547 = vadd.f32 %v1473, %v1546
    %v1548 = vpop.f32.mrf.mxu0
    %1549 = vmatprep.mubr.f32.mxu0 0.0
    %1550 = vmatmul.mubr.f32.gmra.mxu0 %v1478
    %v1551 = vpop.f32.mrf.mxu0
    %v1552 = vadd.f32 %v1473, %v1551
    %v1553 = vpop.f32.mrf.mxu0
    %1554 = vdwg.mxu0
    %v1555 = vadd.f32 %v55, %v1547
    %v1556 = vadd.f32 %v56, %v1552
    %v1557 = vld [vmem:[#allocation4 + $0xe0] sm:$0xff]
    %v1558 = vld [vmem:[#allocation4 + $0xe8] sm:$0xff]
    %v1559 = vld [vmem:[#allocation4 + $0xf0] sm:$0xff]
    %v1560 = vld [vmem:[#allocation4 + $0xf8] sm:$0xff]
    %v1561 = vld [vmem:[#allocation4 + $0x100] sm:$0xff]
    %v1562 = vld [vmem:[#allocation4 + $0x108] sm:$0xff]
    %v1563 = vld [vmem:[#allocation4 + $0x110] sm:$0xff]
    %v1564 = vld [vmem:[#allocation4 + $0x118] sm:$0xff]
    %1566 = vset.pattern.permute.xlu0 0
    %1567 = vperm.xlu0 %1566, %v1561
    %v1568 = vpop.permute.xlu0 %1567
    %1571 = vset.pattern.permute.xlu0 0
    %1572 = vperm.xlu0 %1571, %v1562
    %v1573 = vpop.permute.xlu0 %1572
    %1576 = vset.pattern.permute.xlu0 0
    %1577 = vperm.xlu0 %1576, %v1563
    %v1578 = vpop.permute.xlu0 %1577
    %1581 = vset.pattern.permute.xlu0 0
    %1582 = vperm.xlu0 %1581, %v1564
    %v1583 = vpop.permute.xlu0 %1582
    %v1586 = vsel %vm59, %v1557, 0
    %v1589 = vsel %vm59, %v1558, 0
    %v1592 = vsel %vm59, %v1559, 0
    %v1595 = vsel %vm59, %v1560, 0
    %v1598 = vsel %vm59, %v1555, 0
    %1600 = vmatprep.subr.mxu0 0.0
    %1601 = vmatpush1.xpose.msra.mxu0 0.0
    %1602 = vmatprep.subr.mxu0 0.0
    %1603 = vmatpush1.xpose.msra.mxu0 0.0
    %1604 = vmatprep.subr.mxu0 0.0
    %1605 = vmatpush1.xpose.msra.mxu0 0.0
    %1606 = vmatprep.subr.mxu0 0.0
    %1607 = vmatpush1.xpose.msra.mxu0 0.0
    %1608 = vmatprep.subr.mxu0 0.0
    %1609 = vmatpush1.xpose.msra.mxu0 0.0
    %1610 = vmatprep.subr.mxu0 0.0
    %1611 = vmatpush1.xpose.msra.mxu0 0.0
    %1612 = vmatprep.subr.mxu0 0.0
    %1613 = vmatpush1.xpose.msra.mxu0 0.0
    %1614 = vmatprep.subr.mxu0 0.0
    %1615 = vmatpush1.xpose.msra.mxu0 0.0
    %1616 = vmatprep.subr.mxu0 0.0
    %1617 = vmatpush1.xpose.msra.mxu0 0.0
    %1618 = vmatprep.subr.mxu0 0.0
    %1619 = vmatpush1.xpose.msra.mxu0 0.0
    %1620 = vmatprep.subr.mxu0 0.0
    %1621 = vmatpush1.xpose.msra.mxu0 0.0
    %1622 = vmatprep.subr.mxu0 0.0
    %1623 = vmatpush1.xpose.msra.mxu0 0.0
    %1624 = vmatprep.subr.mxu0 0.0
    %1625 = vmatpush1.xpose.msra.mxu0 0.0
    %1626 = vmatprep.subr.mxu0 0.0
    %1627 = vmatpush1.xpose.msra.mxu0 0.0
    %1628 = vmatprep.subr.mxu0 0.0
    %1629 = vmatpush1.xpose.msra.mxu0 0.0
    %1630 = vmatprep.subr.mxu0 0.0
    %1631 = vmatpush1.xpose.msra.mxu0 %v1598
    %1632 = vmatprep.subr.mxu0 0.0
    %1633 = vmatpush2.xpose.msra.mxu0 0.0
    %1634 = vmatprep.subr.mxu0 0.0
    %1635 = vmatpush2.xpose.msra.mxu0 0.0
    %1636 = vmatprep.subr.mxu0 0.0
    %1637 = vmatpush2.xpose.msra.mxu0 0.0
    %1638 = vmatprep.subr.mxu0 0.0
    %1639 = vmatpush2.xpose.msra.mxu0 0.0
    %1640 = vmatprep.subr.mxu0 0.0
    %1641 = vmatpush2.xpose.msra.mxu0 0.0
    %1642 = vmatprep.subr.mxu0 0.0
    %1643 = vmatpush2.xpose.msra.mxu0 0.0
    %1644 = vmatprep.subr.mxu0 0.0
    %1645 = vmatpush2.xpose.msra.mxu0 0.0
    %1646 = vmatprep.subr.mxu0 0.0
    %1647 = vmatpush2.xpose.msra.mxu0 0.0
    %1648 = vmatprep.subr.mxu0 0.0
    %1649 = vmatpush2.xpose.msra.mxu0 0.0
    %1650 = vmatprep.subr.mxu0 0.0
    %1651 = vmatpush2.xpose.msra.mxu0 0.0
    %1652 = vmatprep.subr.mxu0 0.0
    %1653 = vmatpush2.xpose.msra.mxu0 0.0
    %1654 = vmatprep.subr.mxu0 0.0
    %1655 = vmatpush2.xpose.msra.mxu0 0.0
    %1656 = vmatprep.subr.mxu0 0.0
    %1657 = vmatpush2.xpose.msra.mxu0 0.0
    %1658 = vmatprep.subr.mxu0 0.0
    %1659 = vmatpush2.xpose.msra.mxu0 0.0
    %1660 = vmatprep.subr.mxu0 0.0
    %1661 = vmatpush2.xpose.msra.mxu0 0.0
    %1662 = vmatprep.subr.mxu0 0.0
    %1663 = vmatpush2.xpose.msra.mxu0 0.0
    %1664 = vmatprep.mubr.f32.mxu0 0.0
    %1665 = vmatmul.mubr.f32.gmra.mxu0 %v1586
    %v1666 = vpop.f32.mrf.mxu0
    %v1667 = vadd.f32 %v1568, %v1666
    %v1668 = vpop.f32.mrf.mxu0
    %1669 = vmatprep.mubr.f32.mxu0 0.0
    %1670 = vmatmul.mubr.f32.gmra.mxu0 %v1589
    %v1671 = vpop.f32.mrf.mxu0
    %v1672 = vadd.f32 %v1573, %v1671
    %v1673 = vpop.f32.mrf.mxu0
    %1674 = vmatprep.mubr.f32.mxu0 0.0
    %1675 = vmatmul.mubr.f32.gmra.mxu0 %v1592
    %v1676 = vpop.f32.mrf.mxu0
    %v1677 = vadd.f32 %v1578, %v1676
    %v1678 = vpop.f32.mrf.mxu0
    %1679 = vmatprep.mubr.f32.mxu0 0.0
    %1680 = vmatmul.mubr.f32.gmra.mxu0 %v1595
    %v1681 = vpop.f32.mrf.mxu0
    %v1682 = vadd.f32 %v1583, %v1681
    %v1683 = vpop.f32.mrf.mxu0
    %1684 = vdwg.mxu0
    %vm1685 = vcmask 64512
    %1686 = vst.msk [vmem:[%s3] sm:$0xff] %vm1685, %v1667
    %1687 = vst.msk [vmem:[%s3 + $0x8] sm:$0xff] %vm1685, %v1672
    %1688 = vst.msk [vmem:[%s3 + $0x10] sm:$0xff] %vm1685, %v1677
    %1689 = vst.msk [vmem:[%s3 + $0x18] sm:$0xff] %vm1685, %v1682
    %v1691 = vsel %vm59, %v1556, 0
    %1693 = vmatprep.subr.mxu0 0.0
    %1694 = vmatpush1.xpose.msra.mxu0 0.0
    %1695 = vmatprep.subr.mxu0 0.0
    %1696 = vmatpush1.xpose.msra.mxu0 0.0
    %1697 = vmatprep.subr.mxu0 0.0
    %1698 = vmatpush1.xpose.msra.mxu0 0.0
    %1699 = vmatprep.subr.mxu0 0.0
    %1700 = vmatpush1.xpose.msra.mxu0 0.0
    %1701 = vmatprep.subr.mxu0 0.0
    %1702 = vmatpush1.xpose.msra.mxu0 0.0
    %1703 = vmatprep.subr.mxu0 0.0
    %1704 = vmatpush1.xpose.msra.mxu0 0.0
    %1705 = vmatprep.subr.mxu0 0.0
    %1706 = vmatpush1.xpose.msra.mxu0 0.0
    %1707 = vmatprep.subr.mxu0 0.0
    %1708 = vmatpush1.xpose.msra.mxu0 0.0
    %1709 = vmatprep.subr.mxu0 0.0
    %1710 = vmatpush1.xpose.msra.mxu0 0.0
    %1711 = vmatprep.subr.mxu0 0.0
    %1712 = vmatpush1.xpose.msra.mxu0 0.0
    %1713 = vmatprep.subr.mxu0 0.0
    %1714 = vmatpush1.xpose.msra.mxu0 0.0
    %1715 = vmatprep.subr.mxu0 0.0
    %1716 = vmatpush1.xpose.msra.mxu0 0.0
    %1717 = vmatprep.subr.mxu0 0.0
    %1718 = vmatpush1.xpose.msra.mxu0 0.0
    %1719 = vmatprep.subr.mxu0 0.0
    %1720 = vmatpush1.xpose.msra.mxu0 0.0
    %1721 = vmatprep.subr.mxu0 0.0
    %1722 = vmatpush1.xpose.msra.mxu0 0.0
    %1723 = vmatprep.subr.mxu0 0.0
    %1724 = vmatpush1.xpose.msra.mxu0 %v1691
    %1725 = vmatprep.subr.mxu0 0.0
    %1726 = vmatpush2.xpose.msra.mxu0 0.0
    %1727 = vmatprep.subr.mxu0 0.0
    %1728 = vmatpush2.xpose.msra.mxu0 0.0
    %1729 = vmatprep.subr.mxu0 0.0
    %1730 = vmatpush2.xpose.msra.mxu0 0.0
    %1731 = vmatprep.subr.mxu0 0.0
    %1732 = vmatpush2.xpose.msra.mxu0 0.0
    %1733 = vmatprep.subr.mxu0 0.0
    %1734 = vmatpush2.xpose.msra.mxu0 0.0
    %1735 = vmatprep.subr.mxu0 0.0
    %1736 = vmatpush2.xpose.msra.mxu0 0.0
    %1737 = vmatprep.subr.mxu0 0.0
    %1738 = vmatpush2.xpose.msra.mxu0 0.0
    %1739 = vmatprep.subr.mxu0 0.0
    %1740 = vmatpush2.xpose.msra.mxu0 0.0
    %1741 = vmatprep.subr.mxu0 0.0
    %1742 = vmatpush2.xpose.msra.mxu0 0.0
    %1743 = vmatprep.subr.mxu0 0.0
    %1744 = vmatpush2.xpose.msra.mxu0 0.0
    %1745 = vmatprep.subr.mxu0 0.0
    %1746 = vmatpush2.xpose.msra.mxu0 0.0
    %1747 = vmatprep.subr.mxu0 0.0
    %1748 = vmatpush2.xpose.msra.mxu0 0.0
    %1749 = vmatprep.subr.mxu0 0.0
    %1750 = vmatpush2.xpose.msra.mxu0 0.0
    %1751 = vmatprep.subr.mxu0 0.0
    %1752 = vmatpush2.xpose.msra.mxu0 0.0
    %1753 = vmatprep.subr.mxu0 0.0
    %1754 = vmatpush2.xpose.msra.mxu0 0.0
    %1755 = vmatprep.subr.mxu0 0.0
    %1756 = vmatpush2.xpose.msra.mxu0 0.0
    %1757 = vmatprep.mubr.f32.mxu0 0.0
    %1758 = vmatmul.mubr.f32.gmra.mxu0 %v1586
    %v1759 = vpop.f32.mrf.mxu0
    %v1760 = vadd.f32 %v1568, %v1759
    %v1761 = vpop.f32.mrf.mxu0
    %1762 = vmatprep.mubr.f32.mxu0 0.0
    %1763 = vmatmul.mubr.f32.gmra.mxu0 %v1589
    %v1764 = vpop.f32.mrf.mxu0
    %v1765 = vadd.f32 %v1573, %v1764
    %v1766 = vpop.f32.mrf.mxu0
    %1767 = vmatprep.mubr.f32.mxu0 0.0
    %1768 = vmatmul.mubr.f32.gmra.mxu0 %v1592
    %v1769 = vpop.f32.mrf.mxu0
    %v1770 = vadd.f32 %v1578, %v1769
    %v1771 = vpop.f32.mrf.mxu0
    %1772 = vmatprep.mubr.f32.mxu0 0.0
    %1773 = vmatmul.mubr.f32.gmra.mxu0 %v1595
    %v1774 = vpop.f32.mrf.mxu0
    %v1775 = vadd.f32 %v1583, %v1774
    %v1776 = vpop.f32.mrf.mxu0
    %1777 = vdwg.mxu0
    %s1778 = scalar_lea.vmem %s3, 32
    %1779 = vst.msk [vmem:[%s1778] sm:$0xff] %vm1685, %v1760
    %1780 = vst.msk [vmem:[%s1778 + $0x8] sm:$0xff] %vm1685, %v1765
    %1781 = vst.msk [vmem:[%s1778 + $0x10] sm:$0xff] %vm1685, %v1770
    %1782 = vst.msk [vmem:[%s1778 + $0x18] sm:$0xff] %vm1685, %v1775
    // Predicated region
    $region22: #{forward.2} parent=1 // pred_check
      _
    $region23: #{forward.2} parent=1 // pred_check_branch
      %1784 = sbr.rel (0) target = $region25
    $region24: #{forward.2} parent=1 // pred_region
      _
    $region25: #{forward.2} parent=1 // pred_fallthru
      _
    // Predicated region
    $region26: #{forward.2} parent=1 // pred_check
      _
    $region27: #{forward.2} parent=1 // pred_check_branch
      %1786 = sbr.rel (0) target = $region29
    $region28: #{forward.2} parent=1 // pred_region
      _
    $region29: #{forward.2} parent=1 // pred_fallthru
      _
    %1787 = vsyncpa [#allocation3], 1
    %1788 = vsyncpa [#allocation5], 1

</llo_original>
